<compile_context>
chip_gen: v7x
topology: tpu7x:2x2x1
jax: 0.10.0
libtpu: 0.0.40
codegen_flags: <defaults>
</compile_context>

<pallas_src>
import functools

import jax
import jax.numpy as jnp
from jax.experimental import pallas as pl
from jax.experimental.pallas import tpu as pltpu

LANE = 128
SUBLANE = 8


def _round_up(x, m):
    return (x + m - 1) // m * m


# ---------------------------------------------------------------------------
# Pallas kernel: fused MLP stack (Linear -> ReLU -> ... -> Linear)
# Activations stay resident on-chip for the whole stack.
# ---------------------------------------------------------------------------
def _fused_mlp_kernel(x_ref, *refs, n_layers, compute_dtype):
    o_ref = refs[-1]
    h = x_ref[...].astype(compute_dtype)          # single cast before dot 0
    for i in range(n_layers):
        w = refs[2 * i][...]                       # already bf16 (pre-cast)
        b = refs[2 * i + 1][...]                   # f32
        acc = jnp.dot(h, w, preferred_element_type=jnp.float32) + b
        if i < n_layers - 1:
            acc = jnp.maximum(acc, 0.0)            # f32 elementwise (v5e-safe)
            h = acc.astype(compute_dtype)
        else:
            h = acc
    o_ref[...] = h.astype(o_ref.dtype)


def fused_mlp(x, layers, *, tm_max=1024, compute_dtype=jnp.bfloat16,
              out_dtype=jnp.float32, out_cols=None):
    """Run a whole MLP stack in one pallas_call.

    layers: list of (wp, bp); wp is bf16 (K_i, Np_i) (pad cols exact zeros),
            bp is f32 (1, Np_i).  layers[0]'s K must equal x.shape[1]; every
            other width is a multiple of 128.
    x:      (M, K) activations (f32 or bf16).
    Returns (M, Np_last) in out_dtype, optionally sliced to out_cols columns.
    """
    M, K = x.shape
    assert K == layers[0][0].shape[0], (K, layers[0][0].shape)
    Nlp = layers[-1][0].shape[1]

    # >= 2 grid steps so ("parallel",) can shard across both v7x TensorCores.
    tm = min(tm_max, _round_up(pl.cdiv(M, 2), SUBLANE))
    grid = (pl.cdiv(M, tm),)

    in_specs = [pl.BlockSpec((tm, K), lambda i: (i, 0))]
    flat_wb = []
    for wp, bp in layers:
        # Full weight / bias as one block with a constant block index: Pallas
        # keeps it VMEM-resident across all row tiles (one DMA each).
        # TODO(synk): pipeline_mode=pl.Buffered(1) would drop the redundant
        #             second weight buffer on VMEM-tight v7x configs.
        in_specs.append(pl.BlockSpec(wp.shape, lambda i: (0, 0)))
        in_specs.append(pl.BlockSpec(bp.shape, lambda i: (0, 0)))
        flat_wb += [wp, bp]

    out = pl.pallas_call(
        functools.partial(_fused_mlp_kernel, n_layers=len(layers),
                          compute_dtype=compute_dtype),
        out_shape=jax.ShapeDtypeStruct((M, Nlp), out_dtype),
        grid_spec=pltpu.PrefetchScalarGridSpec(
            num_scalar_prefetch=0,
            grid=grid,
            in_specs=in_specs,
            out_specs=pl.BlockSpec((tm, Nlp), lambda i: (i, 0)),
        ),
        compiler_params=pltpu.CompilerParams(
            dimension_semantics=("parallel",)),
    )(x, *flat_wb)

    if out_cols is not None:
        out = out[:, :out_cols]
    return out


# ---------------------------------------------------------------------------
# Plain-JAX pieces with no clean Pallas equivalent
# ---------------------------------------------------------------------------
def special_procrustes(mats, *, n_squarings=6, n_power_steps=2):
    """Nearest rotation in SO(3) to each 3x3 matrix (roma.special_procrustes).

    Batched 3x3 SVD is a slow iterative custom call on TPU, so we use the
    exact quaternion formulation: argmax_{R in SO(3)} tr(R^T M) is R(q) where
    q is the dominant eigenvector of a symmetric 4x4 matrix N(M).  The
    eigenvector is extracted via repeated squaring of the shifted/normalized
    N plus a couple of power steps — vectorized 4x4 math over all faces.
    """
    m = mats.astype(jnp.float32)
    m00, m01, m02 = m[:, 0, 0], m[:, 0, 1], m[:, 0, 2]
    m10, m11, m12 = m[:, 1, 0], m[:, 1, 1], m[:, 1, 2]
    m20, m21, m22 = m[:, 2, 0], m[:, 2, 1], m[:, 2, 2]

    n = jnp.stack([
        jnp.stack([m00 + m11 + m22, m21 - m12, m02 - m20, m10 - m01], -1),
        jnp.stack([m21 - m12, m00 - m11 - m22, m01 + m10, m02 + m20], -1),
        jnp.stack([m02 - m20, m01 + m10, m11 - m00 - m22, m12 + m21], -1),
        jnp.stack([m10 - m01, m02 + m20, m12 + m21, m22 - m00 - m11], -1),
    ], axis=-2)                                                   # (F, 4, 4)

    # Shift/scale so eigenvalues land in [0, 1]; sqrt(3)*||M||_F bounds
    # |lambda(N)| and the monotone shift keeps the dominant eigenvector.
    s = jnp.sqrt(3.0) * jnp.linalg.norm(m.reshape(-1, 9), axis=-1) + 1e-20
    a = n / (2.0 * s)[:, None, None] + 0.5 * jnp.eye(4, dtype=jnp.float32)

    for _ in range(n_squarings):                  # a <- a^2, renormalized
        a = jnp.einsum('fij,fjk->fik', a, a)
        a = a / (jnp.max(jnp.abs(a), axis=(1, 2), keepdims=True) + 1e-30)

    # a ~ c * q q^T: its largest column is a robust estimate of q.
    col = jnp.argmax(jnp.sum(a * a, axis=1), axis=-1)             # (F,)
    q = jnp.take_along_axis(a, col[:, None, None], axis=2)[..., 0]
    for _ in range(n_power_steps):
        q = jnp.einsum('fij,fj->fi', a, q)
        q = q * jax.lax.rsqrt(jnp.sum(q * q, -1, keepdims=True) + 1e-30)

    w, x, y, z = q[:, 0], q[:, 1], q[:, 2], q[:, 3]
    return jnp.stack([
        jnp.stack([w*w + x*x - y*y - z*z, 2*(x*y - w*z), 2*(x*z + w*y)], -1),
        jnp.stack([2*(x*y + w*z), w*w - x*x + y*y - z*z, 2*(y*z - w*x)], -1),
        jnp.stack([2*(x*z - w*y), 2*(y*z + w*x), w*w - x*x - y*y + z*z], -1),
    ], axis=-2)


def prism_to_vertices(prism, faces, verts):
    """Average prism corner features back onto their vertices."""
    # TODO(synk): data-dependent scatter-add kept in XLA (.at[].add).
    n = verts.shape[0]
    d = prism.shape[-1]
    idx = faces.reshape(-1)
    feats = jnp.zeros((n, d), jnp.float32).at[idx].add(prism.reshape(-1, d))
    counts = jnp.zeros((n,), jnp.float32).at[idx].add(1.0)
    return feats / jnp.maximum(counts, 1.0)[:, None]


# ---------------------------------------------------------------------------
# PrismDecoder forward
# ---------------------------------------------------------------------------
def prism_decoder_forward(params, pos, face, x_in):
    """pos: (bs, Vb, 3), face: (3, F) int32, x_in: (V, dim_in)."""
    bs = pos.shape[0]
    verts = pos.reshape(-1, 3)          # (V, 3)
    faces = face.T                      # (F, 3)
    prism_base = verts[faces]           # (F, 3, 3)

    # DiffusionNet surrogate: per-vertex MLP, whole stack fused in one kernel.
    # Output stays column-padded (pad cols exact zeros) and is stored bf16 to
    # halve the HBM writeback and gather read bytes.
    x = fused_mlp(x_in, params['dnet'], out_dtype=jnp.bfloat16)   # (V, Cp) bf16

    # Gather features at face corners and average (no (F,3,Cp) stacking).
    # TODO(synk): fuse this gather+mean into the refine kernel (scalar-prefetch
    #             face ids + in-kernel row gather) to skip the HBM round trip.
    f0, f1, f2 = faces[:, 0], faces[:, 1], faces[:, 2]
    feat = ((x[f0].astype(jnp.float32) + x[f1] + x[f2])
            * (1.0 / 3.0)).astype(jnp.bfloat16)                  # (F, Cp) bf16

    # mlp_refine: whole stack fused in one kernel.
    h = fused_mlp(feat, params['refine'],
                  out_dtype=jnp.float32, out_cols=12)             # (F, 12)

    rotations = special_procrustes(h[:, :9].reshape(-1, 3, 3))    # (F, 3, 3)
    translations = h[:, 9:12].reshape(-1, 3)                      # (F, 3)
    # Matches the PyTorch spec: prism_base @ rotations + translations[:, None]
    transformed_prism = (jnp.einsum('fij,fjk->fik', prism_base, rotations)
                         + translations[:, None, :])              # (F, 3, 3)

    features = prism_to_vertices(transformed_prism, faces, verts)  # (V, 3)
    features = features.reshape(bs, -1, 3)
    return features, transformed_prism, rotations


# ---------------------------------------------------------------------------
# Deterministic parameter init (PyTorch nn.Linear default: U(-1/sqrt(fan_in)))
# Weights are zero-padded ONCE here (widths rounded up to 128 lanes) and then
# cast to bf16; pad columns therefore stay exactly zero.
# ---------------------------------------------------------------------------
def _init_linear(key, fan_in, fan_out):
    kw, kb = jax.random.split(key)
    bound = 1.0 / jnp.sqrt(jnp.float32(fan_in))
    w = jax.random.uniform(kw, (fan_in, fan_out), jnp.float32, -bound, bound)
    b = jax.random.uniform(kb, (fan_out,), jnp.float32, -bound, bound)
    return w, b


def _pad_linear(w, b, *, pad_k=True, weight_dtype=jnp.bfloat16):
    K, N = w.shape
    Kp = _round_up(K, LANE) if pad_k else K
    Np = _round_up(N, LANE)
    wp = jnp.zeros((Kp, Np), jnp.float32).at[:K, :N].set(w).astype(weight_dtype)
    bp = jnp.zeros((1, Np), jnp.float32).at[0, :N].set(b)
    return wp, bp


def make_params(key, dim_in, dim_out, n_width, n_block):
    # NOTE: n_width < 128 is padded to 128 lanes, wasting MXU flops; prefer
    # native widths in {128, 256} on v6e/v7x if the model permits.
    dnet_dims = ([(dim_in, n_width)]
                 + [(n_width, n_width)] * n_block
                 + [(n_width, dim_out)])
    refine_dims = [(dim_out, dim_out), (dim_out, 512), (512, 256),
                   (256, 128), (128, 64), (64, 12)]
    keys = jax.random.split(key, len(dnet_dims) + len(refine_dims))
    dnet = []
    for idx, (k, (fi, fo)) in enumerate(zip(keys[:len(dnet_dims)], dnet_dims)):
        # Layer 0 keeps its raw K so the input activation needs no host-side
        # zero-pad copy; hidden layers pad K to match the previous padded N.
        dnet.append(_pad_linear(*_init_linear(k, fi, fo), pad_k=(idx > 0)))
    refine = [_pad_linear(*_init_linear(k, fi, fo), pad_k=True)
              for k, (fi, fo) in zip(keys[len(dnet_dims):], refine_dims)]
    return {'dnet': dnet, 'refine': refine}


if __name__ == "__main__":
    key = jax.random.PRNGKey(0)
    dim_in, dim_out, n_width, n_block = 64, 64, 32, 2
    bs, v_per_batch, n_faces = 2, 32, 96
    n_verts = bs * v_per_batch

    k_pos, k_face, k_x, k_par = jax.random.split(key, 4)
    pos = jax.random.normal(k_pos, (bs, v_per_batch, 3), jnp.float32)
    face = jax.random.randint(k_face, (3, n_faces), 0, n_verts, jnp.int32)
    x_in = jax.random.normal(k_x, (n_verts, dim_in), jnp.float32)

    params = make_params(k_par, dim_in, dim_out, n_width, n_block)

    fwd = jax.jit(prism_decoder_forward)
    features, transformed_prism, rotations = fwd(params, pos, face, x_in)
    jax.block_until_ready((features, transformed_prism, rotations))

    assert features.shape == (bs, v_per_batch, 3)
    assert transformed_prism.shape == (n_faces, 3, 3)
    assert rotations.shape == (n_faces, 3, 3)
    print("KERNEL_OK")
</pallas_src>

<mosaic_0001>
module attributes {stable_mosaic.version = 11 : i64} {
  func.func private @main(%arg0: i32) attributes {dimension_semantics = [#tpu.dimension_semantics<core_parallel>], iteration_bounds = array<i64: 2>, tpu.core_type = #tpu.core_type<sc_scalar_subcore>, window_params = []} {
    return
  }
}

module attributes {stable_mosaic.version = 11 : i64} {
  func.func private @main(%arg0: i32) attributes {dimension_semantics = [#tpu.dimension_semantics<core_parallel>], iteration_bounds = array<i64: 2>, tpu.core_type = #tpu.core_type<sc_scalar_subcore>, window_params = []} {
    return
  }
}

module attributes {stable_mosaic.version = 11 : i64} {
  func.func @_fused_mlp_kernel(%arg0: i32, %arg1: memref<48x128xbf16, #tpu.memory_space<vmem>>, %arg2: memref<128x128xbf16, #tpu.memory_space<vmem>>, %arg3: memref<1x128xf32, #tpu.memory_space<vmem>>, %arg4: memref<128x512xbf16, #tpu.memory_space<vmem>>, %arg5: memref<1x512xf32, #tpu.memory_space<vmem>>, %arg6: memref<512x256xbf16, #tpu.memory_space<vmem>>, %arg7: memref<1x256xf32, #tpu.memory_space<vmem>>, %arg8: memref<256x128xbf16, #tpu.memory_space<vmem>>, %arg9: memref<1x128xf32, #tpu.memory_space<vmem>>, %arg10: memref<128x128xbf16, #tpu.memory_space<vmem>>, %arg11: memref<1x128xf32, #tpu.memory_space<vmem>>, %arg12: memref<128x128xbf16, #tpu.memory_space<vmem>>, %arg13: memref<1x128xf32, #tpu.memory_space<vmem>>, %arg14: memref<48x128xf32, #tpu.memory_space<vmem>>) attributes {dimension_semantics = [#tpu.dimension_semantics<parallel>], iteration_bounds = array<i64: 2>, scalar_prefetch = 0 : i64, scratch_operands = 0 : i64, tpu.core_type = #tpu.core_type<tc>, window_params = [{transform_indices = @transform_0, window_bounds = array<i64: 48, 128>}, {pipeline_mode = #tpu.pipeline_mode<synchronous>, transform_indices = @transform_1, window_bounds = array<i64: 128, 128>}, {pipeline_mode = #tpu.pipeline_mode<synchronous>, transform_indices = @transform_2, window_bounds = array<i64: 1, 128>}, {pipeline_mode = #tpu.pipeline_mode<synchronous>, transform_indices = @transform_3, window_bounds = array<i64: 128, 512>}, {pipeline_mode = #tpu.pipeline_mode<synchronous>, transform_indices = @transform_4, window_bounds = array<i64: 1, 512>}, {pipeline_mode = #tpu.pipeline_mode<synchronous>, transform_indices = @transform_5, window_bounds = array<i64: 512, 256>}, {pipeline_mode = #tpu.pipeline_mode<synchronous>, transform_indices = @transform_6, window_bounds = array<i64: 1, 256>}, {pipeline_mode = #tpu.pipeline_mode<synchronous>, transform_indices = @transform_7, window_bounds = array<i64: 256, 128>}, {pipeline_mode = #tpu.pipeline_mode<synchronous>, transform_indices = @transform_8, window_bounds = array<i64: 1, 128>}, {pipeline_mode = #tpu.pipeline_mode<synchronous>, transform_indices = @transform_9, window_bounds = array<i64: 128, 128>}, {pipeline_mode = #tpu.pipeline_mode<synchronous>, transform_indices = @transform_10, window_bounds = array<i64: 1, 128>}, {pipeline_mode = #tpu.pipeline_mode<synchronous>, transform_indices = @transform_11, window_bounds = array<i64: 128, 128>}, {pipeline_mode = #tpu.pipeline_mode<synchronous>, transform_indices = @transform_12, window_bounds = array<i64: 1, 128>}, {transform_indices = @transform_13, window_bounds = array<i64: 48, 128>}]} {
    %c0 = arith.constant 0 : index
    %c0_0 = arith.constant 0 : index
    %0 = vector.load %arg1[%c0, %c0_0] : memref<48x128xbf16, #tpu.memory_space<vmem>>, vector<48x128xbf16>
    %c0_1 = arith.constant 0 : index
    %c0_2 = arith.constant 0 : index
    %1 = vector.load %arg2[%c0_1, %c0_2] : memref<128x128xbf16, #tpu.memory_space<vmem>>, vector<128x128xbf16>
    %c0_3 = arith.constant 0 : index
    %c0_4 = arith.constant 0 : index
    %2 = vector.load %arg3[%c0_3, %c0_4] : memref<1x128xf32, #tpu.memory_space<vmem>>, vector<1x128xf32>
    %cst = arith.constant dense<0.000000e+00> : vector<48x128xf32>
    %3 = tpu.matmul %0, %1, %cst {dimension_numbers = #tpu.dot_dimension_numbers<[1], [0], [0], [1], [0, 0, 1, 1], [], []>} : vector<48x128xbf16>, vector<128x128xbf16>, vector<48x128xf32> -> vector<48x128xf32>
    %4 = vector.broadcast %2 : vector<1x128xf32> to vector<48x128xf32>
    %5 = arith.addf %3, %4 : vector<48x128xf32>
    %cst_5 = arith.constant 0.000000e+00 : f32
    %6 = vector.broadcast %cst_5 : f32 to vector<48x128xf32>
    %7 = arith.maximumf %5, %6 : vector<48x128xf32>
    %8 = arith.truncf %7 : vector<48x128xf32> to vector<48x128xbf16>
    %c0_6 = arith.constant 0 : index
    %c0_7 = arith.constant 0 : index
    %9 = vector.load %arg4[%c0_6, %c0_7] : memref<128x512xbf16, #tpu.memory_space<vmem>>, vector<128x512xbf16>
    %c0_8 = arith.constant 0 : index
    %c0_9 = arith.constant 0 : index
    %10 = vector.load %arg5[%c0_8, %c0_9] : memref<1x512xf32, #tpu.memory_space<vmem>>, vector<1x512xf32>
    %cst_10 = arith.constant dense<0.000000e+00> : vector<48x512xf32>
    %11 = tpu.matmul %8, %9, %cst_10 {dimension_numbers = #tpu.dot_dimension_numbers<[1], [0], [0], [1], [0, 0, 1, 1], [], []>} : vector<48x128xbf16>, vector<128x512xbf16>, vector<48x512xf32> -> vector<48x512xf32>
    %12 = vector.broadcast %10 : vector<1x512xf32> to vector<48x512xf32>
    %13 = arith.addf %11, %12 : vector<48x512xf32>
    %cst_11 = arith.constant 0.000000e+00 : f32
    %14 = vector.broadcast %cst_11 : f32 to vector<48x512xf32>
    %15 = arith.maximumf %13, %14 : vector<48x512xf32>
    %16 = arith.truncf %15 : vector<48x512xf32> to vector<48x512xbf16>
    %c0_12 = arith.constant 0 : index
    %c0_13 = arith.constant 0 : index
    %17 = vector.load %arg6[%c0_12, %c0_13] : memref<512x256xbf16, #tpu.memory_space<vmem>>, vector<512x256xbf16>
    %c0_14 = arith.constant 0 : index
    %c0_15 = arith.constant 0 : index
    %18 = vector.load %arg7[%c0_14, %c0_15] : memref<1x256xf32, #tpu.memory_space<vmem>>, vector<1x256xf32>
    %cst_16 = arith.constant dense<0.000000e+00> : vector<48x256xf32>
    %19 = tpu.matmul %16, %17, %cst_16 {dimension_numbers = #tpu.dot_dimension_numbers<[1], [0], [0], [1], [0, 0, 1, 1], [], []>} : vector<48x512xbf16>, vector<512x256xbf16>, vector<48x256xf32> -> vector<48x256xf32>
    %20 = vector.broadcast %18 : vector<1x256xf32> to vector<48x256xf32>
    %21 = arith.addf %19, %20 : vector<48x256xf32>
    %cst_17 = arith.constant 0.000000e+00 : f32
    %22 = vector.broadcast %cst_17 : f32 to vector<48x256xf32>
    %23 = arith.maximumf %21, %22 : vector<48x256xf32>
    %24 = arith.truncf %23 : vector<48x256xf32> to vector<48x256xbf16>
    %c0_18 = arith.constant 0 : index
    %c0_19 = arith.constant 0 : index
    %25 = vector.load %arg8[%c0_18, %c0_19] : memref<256x128xbf16, #tpu.memory_space<vmem>>, vector<256x128xbf16>
    %c0_20 = arith.constant 0 : index
    %c0_21 = arith.constant 0 : index
    %26 = vector.load %arg9[%c0_20, %c0_21] : memref<1x128xf32, #tpu.memory_space<vmem>>, vector<1x128xf32>
    %cst_22 = arith.constant dense<0.000000e+00> : vector<48x128xf32>
    %27 = tpu.matmul %24, %25, %cst_22 {dimension_numbers = #tpu.dot_dimension_numbers<[1], [0], [0], [1], [0, 0, 1, 1], [], []>} : vector<48x256xbf16>, vector<256x128xbf16>, vector<48x128xf32> -> vector<48x128xf32>
    %28 = vector.broadcast %26 : vector<1x128xf32> to vector<48x128xf32>
    %29 = arith.addf %27, %28 : vector<48x128xf32>
    %cst_23 = arith.constant 0.000000e+00 : f32
    %30 = vector.broadcast %cst_23 : f32 to vector<48x128xf32>
    %31 = arith.maximumf %29, %30 : vector<48x128xf32>
    %32 = arith.truncf %31 : vector<48x128xf32> to vector<48x128xbf16>
    %c0_24 = arith.constant 0 : index
    %c0_25 = arith.constant 0 : index
    %33 = vector.load %arg10[%c0_24, %c0_25] : memref<128x128xbf16, #tpu.memory_space<vmem>>, vector<128x128xbf16>
    %c0_26 = arith.constant 0 : index
    %c0_27 = arith.constant 0 : index
    %34 = vector.load %arg11[%c0_26, %c0_27] : memref<1x128xf32, #tpu.memory_space<vmem>>, vector<1x128xf32>
    %cst_28 = arith.constant dense<0.000000e+00> : vector<48x128xf32>
    %35 = tpu.matmul %32, %33, %cst_28 {dimension_numbers = #tpu.dot_dimension_numbers<[1], [0], [0], [1], [0, 0, 1, 1], [], []>} : vector<48x128xbf16>, vector<128x128xbf16>, vector<48x128xf32> -> vector<48x128xf32>
    %36 = vector.broadcast %34 : vector<1x128xf32> to vector<48x128xf32>
    %37 = arith.addf %35, %36 : vector<48x128xf32>
    %cst_29 = arith.constant 0.000000e+00 : f32
    %38 = vector.broadcast %cst_29 : f32 to vector<48x128xf32>
    %39 = arith.maximumf %37, %38 : vector<48x128xf32>
    %40 = arith.truncf %39 : vector<48x128xf32> to vector<48x128xbf16>
    %c0_30 = arith.constant 0 : index
    %c0_31 = arith.constant 0 : index
    %41 = vector.load %arg12[%c0_30, %c0_31] : memref<128x128xbf16, #tpu.memory_space<vmem>>, vector<128x128xbf16>
    %c0_32 = arith.constant 0 : index
    %c0_33 = arith.constant 0 : index
    %42 = vector.load %arg13[%c0_32, %c0_33] : memref<1x128xf32, #tpu.memory_space<vmem>>, vector<1x128xf32>
    %cst_34 = arith.constant dense<0.000000e+00> : vector<48x128xf32>
    %43 = tpu.matmul %40, %41, %cst_34 {dimension_numbers = #tpu.dot_dimension_numbers<[1], [0], [0], [1], [0, 0, 1, 1], [], []>} : vector<48x128xbf16>, vector<128x128xbf16>, vector<48x128xf32> -> vector<48x128xf32>
    %44 = vector.broadcast %42 : vector<1x128xf32> to vector<48x128xf32>
    %45 = arith.addf %43, %44 : vector<48x128xf32>
    %c0_35 = arith.constant 0 : index
    %c0_36 = arith.constant 0 : index
    %46 = vector.load %arg14[%c0_35, %c0_36] : memref<48x128xf32, #tpu.memory_space<vmem>>, vector<48x128xf32>
    tpu.vector_store %arg14[%c0_35, %c0_36], %45 {strides = array<i32>} : memref<48x128xf32, #tpu.memory_space<vmem>>, vector<48x128xf32>,
    return
  }
  func.func @transform_0(%arg0: i32) -> (i32, i32) {
    %c0_i32 = arith.constant 0 : i32
    %c0_i32_0 = arith.constant 0 : i32
    return %arg0, %c0_i32 : i32, i32
  }
  func.func @transform_1(%arg0: i32) -> (i32, i32) {
    %c0_i32 = arith.constant 0 : i32
    %c0_i32_0 = arith.constant 0 : i32
    %c0_i32_1 = arith.constant 0 : i32
    return %c0_i32, %c0_i32_0 : i32, i32
  }
  func.func @transform_2(%arg0: i32) -> (i32, i32) {
    %c0_i32 = arith.constant 0 : i32
    %c0_i32_0 = arith.constant 0 : i32
    %c0_i32_1 = arith.constant 0 : i32
    return %c0_i32, %c0_i32_0 : i32, i32
  }
  func.func @transform_3(%arg0: i32) -> (i32, i32) {
    %c0_i32 = arith.constant 0 : i32
    %c0_i32_0 = arith.constant 0 : i32
    %c0_i32_1 = arith.constant 0 : i32
    return %c0_i32, %c0_i32_0 : i32, i32
  }
  func.func @transform_4(%arg0: i32) -> (i32, i32) {
    %c0_i32 = arith.constant 0 : i32
    %c0_i32_0 = arith.constant 0 : i32
    %c0_i32_1 = arith.constant 0 : i32
    return %c0_i32, %c0_i32_0 : i32, i32
  }
  func.func @transform_5(%arg0: i32) -> (i32, i32) {
    %c0_i32 = arith.constant 0 : i32
    %c0_i32_0 = arith.constant 0 : i32
    %c0_i32_1 = arith.constant 0 : i32
    return %c0_i32, %c0_i32_0 : i32, i32
  }
  func.func @transform_6(%arg0: i32) -> (i32, i32) {
    %c0_i32 = arith.constant 0 : i32
    %c0_i32_0 = arith.constant 0 : i32
    %c0_i32_1 = arith.constant 0 : i32
    return %c0_i32, %c0_i32_0 : i32, i32
  }
  func.func @transform_7(%arg0: i32) -> (i32, i32) {
    %c0_i32 = arith.constant 0 : i32
    %c0_i32_0 = arith.constant 0 : i32
    %c0_i32_1 = arith.constant 0 : i32
    return %c0_i32, %c0_i32_0 : i32, i32
  }
  func.func @transform_8(%arg0: i32) -> (i32, i32) {
    %c0_i32 = arith.constant 0 : i32
    %c0_i32_0 = arith.constant 0 : i32
    %c0_i32_1 = arith.constant 0 : i32
    return %c0_i32, %c0_i32_0 : i32, i32
  }
  func.func @transform_9(%arg0: i32) -> (i32, i32) {
    %c0_i32 = arith.constant 0 : i32
    %c0_i32_0 = arith.constant 0 : i32
    %c0_i32_1 = arith.constant 0 : i32
    return %c0_i32, %c0_i32_0 : i32, i32
  }
  func.func @transform_10(%arg0: i32) -> (i32, i32) {
    %c0_i32 = arith.constant 0 : i32
    %c0_i32_0 = arith.constant 0 : i32
    %c0_i32_1 = arith.constant 0 : i32
    return %c0_i32, %c0_i32_0 : i32, i32
  }
  func.func @transform_11(%arg0: i32) -> (i32, i32) {
    %c0_i32 = arith.constant 0 : i32
    %c0_i32_0 = arith.constant 0 : i32
    %c0_i32_1 = arith.constant 0 : i32
    return %c0_i32, %c0_i32_0 : i32, i32
  }
  func.func @transform_12(%arg0: i32) -> (i32, i32) {
    %c0_i32 = arith.constant 0 : i32
    %c0_i32_0 = arith.constant 0 : i32
    %c0_i32_1 = arith.constant 0 : i32
    return %c0_i32, %c0_i32_0 : i32, i32
  }
  func.func @transform_13(%arg0: i32) -> (i32, i32) {
    %c0_i32 = arith.constant 0 : i32
    %c0_i32_0 = arith.constant 0 : i32
    return %arg0, %c0_i32 : i32, i32
  }
}

module attributes {stable_mosaic.version = 11 : i64} {
  func.func @_fused_mlp_kernel(%arg0: i32, %arg1: memref<32x64xf32, #tpu.memory_space<vmem>>, %arg2: memref<64x128xbf16, #tpu.memory_space<vmem>>, %arg3: memref<1x128xf32, #tpu.memory_space<vmem>>, %arg4: memref<128x128xbf16, #tpu.memory_space<vmem>>, %arg5: memref<1x128xf32, #tpu.memory_space<vmem>>, %arg6: memref<128x128xbf16, #tpu.memory_space<vmem>>, %arg7: memref<1x128xf32, #tpu.memory_space<vmem>>, %arg8: memref<128x128xbf16, #tpu.memory_space<vmem>>, %arg9: memref<1x128xf32, #tpu.memory_space<vmem>>, %arg10: memref<32x128xbf16, #tpu.memory_space<vmem>>) attributes {dimension_semantics = [#tpu.dimension_semantics<parallel>], iteration_bounds = array<i64: 2>, scalar_prefetch = 0 : i64, scratch_operands = 0 : i64, tpu.core_type = #tpu.core_type<tc>, window_params = [{transform_indices = @transform_0, window_bounds = array<i64: 32, 64>}, {pipeline_mode = #tpu.pipeline_mode<synchronous>, transform_indices = @transform_1, window_bounds = array<i64: 64, 128>}, {pipeline_mode = #tpu.pipeline_mode<synchronous>, transform_indices = @transform_2, window_bounds = array<i64: 1, 128>}, {pipeline_mode = #tpu.pipeline_mode<synchronous>, transform_indices = @transform_3, window_bounds = array<i64: 128, 128>}, {pipeline_mode = #tpu.pipeline_mode<synchronous>, transform_indices = @transform_4, window_bounds = array<i64: 1, 128>}, {pipeline_mode = #tpu.pipeline_mode<synchronous>, transform_indices = @transform_5, window_bounds = array<i64: 128, 128>}, {pipeline_mode = #tpu.pipeline_mode<synchronous>, transform_indices = @transform_6, window_bounds = array<i64: 1, 128>}, {pipeline_mode = #tpu.pipeline_mode<synchronous>, transform_indices = @transform_7, window_bounds = array<i64: 128, 128>}, {pipeline_mode = #tpu.pipeline_mode<synchronous>, transform_indices = @transform_8, window_bounds = array<i64: 1, 128>}, {transform_indices = @transform_9, window_bounds = array<i64: 32, 128>}]} {
    %c0 = arith.constant 0 : index
    %c0_0 = arith.constant 0 : index
    %0 = vector.load %arg1[%c0, %c0_0] : memref<32x64xf32, #tpu.memory_space<vmem>>, vector<32x64xf32>
    %1 = arith.truncf %0 : vector<32x64xf32> to vector<32x64xbf16>
    %c0_1 = arith.constant 0 : index
    %c0_2 = arith.constant 0 : index
    %2 = vector.load %arg2[%c0_1, %c0_2] : memref<64x128xbf16, #tpu.memory_space<vmem>>, vector<64x128xbf16>
    %c0_3 = arith.constant 0 : index
    %c0_4 = arith.constant 0 : index
    %3 = vector.load %arg3[%c0_3, %c0_4] : memref<1x128xf32, #tpu.memory_space<vmem>>, vector<1x128xf32>
    %cst = arith.constant dense<0.000000e+00> : vector<32x128xf32>
    %4 = tpu.matmul %1, %2, %cst {dimension_numbers = #tpu.dot_dimension_numbers<[1], [0], [0], [1], [0, 0, 1, 1], [], []>} : vector<32x64xbf16>, vector<64x128xbf16>, vector<32x128xf32> -> vector<32x128xf32>
    %5 = vector.broadcast %3 : vector<1x128xf32> to vector<32x128xf32>
    %6 = arith.addf %4, %5 : vector<32x128xf32>
    %cst_5 = arith.constant 0.000000e+00 : f32
    %7 = vector.broadcast %cst_5 : f32 to vector<32x128xf32>
    %8 = arith.maximumf %6, %7 : vector<32x128xf32>
    %9 = arith.truncf %8 : vector<32x128xf32> to vector<32x128xbf16>
    %c0_6 = arith.constant 0 : index
    %c0_7 = arith.constant 0 : index
    %10 = vector.load %arg4[%c0_6, %c0_7] : memref<128x128xbf16, #tpu.memory_space<vmem>>, vector<128x128xbf16>
    %c0_8 = arith.constant 0 : index
    %c0_9 = arith.constant 0 : index
    %11 = vector.load %arg5[%c0_8, %c0_9] : memref<1x128xf32, #tpu.memory_space<vmem>>, vector<1x128xf32>
    %cst_10 = arith.constant dense<0.000000e+00> : vector<32x128xf32>
    %12 = tpu.matmul %9, %10, %cst_10 {dimension_numbers = #tpu.dot_dimension_numbers<[1], [0], [0], [1], [0, 0, 1, 1], [], []>} : vector<32x128xbf16>, vector<128x128xbf16>, vector<32x128xf32> -> vector<32x128xf32>
    %13 = vector.broadcast %11 : vector<1x128xf32> to vector<32x128xf32>
    %14 = arith.addf %12, %13 : vector<32x128xf32>
    %cst_11 = arith.constant 0.000000e+00 : f32
    %15 = vector.broadcast %cst_11 : f32 to vector<32x128xf32>
    %16 = arith.maximumf %14, %15 : vector<32x128xf32>
    %17 = arith.truncf %16 : vector<32x128xf32> to vector<32x128xbf16>
    %c0_12 = arith.constant 0 : index
    %c0_13 = arith.constant 0 : index
    %18 = vector.load %arg6[%c0_12, %c0_13] : memref<128x128xbf16, #tpu.memory_space<vmem>>, vector<128x128xbf16>
    %c0_14 = arith.constant 0 : index
    %c0_15 = arith.constant 0 : index
    %19 = vector.load %arg7[%c0_14, %c0_15] : memref<1x128xf32, #tpu.memory_space<vmem>>, vector<1x128xf32>
    %cst_16 = arith.constant dense<0.000000e+00> : vector<32x128xf32>
    %20 = tpu.matmul %17, %18, %cst_16 {dimension_numbers = #tpu.dot_dimension_numbers<[1], [0], [0], [1], [0, 0, 1, 1], [], []>} : vector<32x128xbf16>, vector<128x128xbf16>, vector<32x128xf32> -> vector<32x128xf32>
    %21 = vector.broadcast %19 : vector<1x128xf32> to vector<32x128xf32>
    %22 = arith.addf %20, %21 : vector<32x128xf32>
    %cst_17 = arith.constant 0.000000e+00 : f32
    %23 = vector.broadcast %cst_17 : f32 to vector<32x128xf32>
    %24 = arith.maximumf %22, %23 : vector<32x128xf32>
    %25 = arith.truncf %24 : vector<32x128xf32> to vector<32x128xbf16>
    %c0_18 = arith.constant 0 : index
    %c0_19 = arith.constant 0 : index
    %26 = vector.load %arg8[%c0_18, %c0_19] : memref<128x128xbf16, #tpu.memory_space<vmem>>, vector<128x128xbf16>
    %c0_20 = arith.constant 0 : index
    %c0_21 = arith.constant 0 : index
    %27 = vector.load %arg9[%c0_20, %c0_21] : memref<1x128xf32, #tpu.memory_space<vmem>>, vector<1x128xf32>
    %cst_22 = arith.constant dense<0.000000e+00> : vector<32x128xf32>
    %28 = tpu.matmul %25, %26, %cst_22 {dimension_numbers = #tpu.dot_dimension_numbers<[1], [0], [0], [1], [0, 0, 1, 1], [], []>} : vector<32x128xbf16>, vector<128x128xbf16>, vector<32x128xf32> -> vector<32x128xf32>
    %29 = vector.broadcast %27 : vector<1x128xf32> to vector<32x128xf32>
    %30 = arith.addf %28, %29 : vector<32x128xf32>
    %31 = arith.truncf %30 : vector<32x128xf32> to vector<32x128xbf16>
    %c0_23 = arith.constant 0 : index
    %c0_24 = arith.constant 0 : index
    %32 = vector.load %arg10[%c0_23, %c0_24] : memref<32x128xbf16, #tpu.memory_space<vmem>>, vector<32x128xbf16>
    tpu.vector_store %arg10[%c0_23, %c0_24], %31 {strides = array<i32>} : memref<32x128xbf16, #tpu.memory_space<vmem>>, vector<32x128xbf16>,
    return
  }
  func.func @transform_0(%arg0: i32) -> (i32, i32) {
    %c0_i32 = arith.constant 0 : i32
    %c0_i32_0 = arith.constant 0 : i32
    return %arg0, %c0_i32 : i32, i32
  }
  func.func @transform_1(%arg0: i32) -> (i32, i32) {
    %c0_i32 = arith.constant 0 : i32
    %c0_i32_0 = arith.constant 0 : i32
    %c0_i32_1 = arith.constant 0 : i32
    return %c0_i32, %c0_i32_0 : i32, i32
  }
  func.func @transform_2(%arg0: i32) -> (i32, i32) {
    %c0_i32 = arith.constant 0 : i32
    %c0_i32_0 = arith.constant 0 : i32
    %c0_i32_1 = arith.constant 0 : i32
    return %c0_i32, %c0_i32_0 : i32, i32
  }
  func.func @transform_3(%arg0: i32) -> (i32, i32) {
    %c0_i32 = arith.constant 0 : i32
    %c0_i32_0 = arith.constant 0 : i32
    %c0_i32_1 = arith.constant 0 : i32
    return %c0_i32, %c0_i32_0 : i32, i32
  }
  func.func @transform_4(%arg0: i32) -> (i32, i32) {
    %c0_i32 = arith.constant 0 : i32
    %c0_i32_0 = arith.constant 0 : i32
    %c0_i32_1 = arith.constant 0 : i32
    return %c0_i32, %c0_i32_0 : i32, i32
  }
  func.func @transform_5(%arg0: i32) -> (i32, i32) {
    %c0_i32 = arith.constant 0 : i32
    %c0_i32_0 = arith.constant 0 : i32
    %c0_i32_1 = arith.constant 0 : i32
    return %c0_i32, %c0_i32_0 : i32, i32
  }
  func.func @transform_6(%arg0: i32) -> (i32, i32) {
    %c0_i32 = arith.constant 0 : i32
    %c0_i32_0 = arith.constant 0 : i32
    %c0_i32_1 = arith.constant 0 : i32
    return %c0_i32, %c0_i32_0 : i32, i32
  }
  func.func @transform_7(%arg0: i32) -> (i32, i32) {
    %c0_i32 = arith.constant 0 : i32
    %c0_i32_0 = arith.constant 0 : i32
    %c0_i32_1 = arith.constant 0 : i32
    return %c0_i32, %c0_i32_0 : i32, i32
  }
  func.func @transform_8(%arg0: i32) -> (i32, i32) {
    %c0_i32 = arith.constant 0 : i32
    %c0_i32_0 = arith.constant 0 : i32
    %c0_i32_1 = arith.constant 0 : i32
    return %c0_i32, %c0_i32_0 : i32, i32
  }
  func.func @transform_9(%arg0: i32) -> (i32, i32) {
    %c0_i32 = arith.constant 0 : i32
    %c0_i32_0 = arith.constant 0 : i32
    return %arg0, %c0_i32 : i32, i32
  }
}

</mosaic_0001>

<llo_original>
// kernel: prism_decoder_forward.2
$region0: #{prism_decoder_forward.2}
  #allocation0 [shape = 'u32[]', space=smem, size = 0x4, offset = 0x4, fixed_abs, tag = 'smem constant byte address 0x4 - core index']
  #allocation1 [shape = 'u32[144,128]{1,0:T(1,128)}', space=vmem, size = 0x12000, scoped, tag = 'internal scratch']
  %s0 = inlined_call_operand.hbm [shape: f32[64,64], index: 0, kind: input, shape index: {}]
  %s1 = inlined_call_operand.vmem [shape: bf16[64,128], index: 1, kind: input, shape index: {}]
  %s2 = inlined_call_operand.vmem [shape: f32[1,128], index: 2, kind: input, shape index: {}]
  %s3 = inlined_call_operand.vmem [shape: bf16[128,128], index: 3, kind: input, shape index: {}]
  %s4 = inlined_call_operand.vmem [shape: f32[1,128], index: 4, kind: input, shape index: {}]
  %s5 = inlined_call_operand.hbm [shape: bf16[128,128], index: 5, kind: input, shape index: {}]
  %s6 = inlined_call_operand.vmem [shape: f32[1,128], index: 6, kind: input, shape index: {}]
  %s7 = inlined_call_operand.hbm [shape: bf16[128,128], index: 7, kind: input, shape index: {}]
  %s8 = inlined_call_operand.vmem [shape: f32[1,128], index: 8, kind: input, shape index: {}]
  %s9 = inlined_call_operand.vmem [shape: bf16[64,128], index: 9, kind: output, shape index: {}]
  %s10 = sld [smem:[#allocation0]]
  $region81: #{prism_decoder_forward.2} parent=0
    _
  %s12 = ssub.s32 1, %s10
  %s13 = scalar_select 0, %s12, %s10
  $region1: #{prism_decoder_forward.2} parent=0
    #allocation2 [shape = 'u8[32768]{0}', space=vmem, size = 0x8000, scoped, tag = 'input window, operand 0']
    #allocation3 [shape = 's32[2]{0}', space=sflag, size = 0x8, scoped, tag = 'scoped memory for prism_decoder_forward.2']
    #allocation4 [shape = 'u8[32768]{0}', space=vmem, size = 0x8000, scoped, tag = 'input window, operand 5, single buffered']
    #allocation5 [shape = 's32[1]{0}', space=sflag, size = 0x4, scoped, tag = 'scoped memory for prism_decoder_forward.2']
    #allocation6 [shape = 'u8[32768]{0}', space=vmem, size = 0x8000, scoped, tag = 'input window, operand 7, single buffered']
    %14 = vsyncpa [#allocation3], 0
    %s15 = scalar_lea.sflag [#allocation3], 1
    %16 = vsyncpa %s15, 0
    %17 = vsyncpa [#allocation5], 0
    loop: start=0, step=1, limit=4
    $region2: #{prism_decoder_forward.2} parent=1 // loop_pre_header
      _
    $region3: #{prism_decoder_forward.2} parent=1 // loop_header
      %s19 = sphi 0, %s23
      %p20 = scmp.ge.s32.totalorder %s19, 4
      %s29 = sphi 0, %s31
      %s32 = sphi 0, %s29
      %s33 = sphi 0, %s32
      %s49 = sphi 0, %s33
      %s53 = sphi 0, %s53
      %s55 = sphi 0, %s53
      %s56 = sphi 0, %s55
      %s70 = sphi 0, %s56
      %s74 = sphi 0, %s74
      %s76 = sphi 0, %s74
      %s77 = sphi 0, %s76
      %s91 = sphi 0, %s77
      %s95 = sphi 0, %s95
      %s97 = sphi 0, %s95
      %s98 = sphi 0, %s97
      %s112 = sphi 0, %s98
      %s116 = sphi 0, %s116
      %s118 = sphi 0, %s116
      %s119 = sphi 0, %s118
      %s133 = sphi 0, %s119
      %s137 = sphi 0, %s137
      %s139 = sphi 0, %s137
      %s140 = sphi 0, %s139
      %s154 = sphi 0, %s140
      %s158 = sphi 0, %s158
      %s160 = sphi 0, %s158
      %s161 = sphi 0, %s160
      %s175 = sphi 0, %s161
      %s179 = sphi 0, %s179
      %s181 = sphi 0, %s179
      %s182 = sphi 0, %s181
      %s196 = sphi 0, %s182
      %s200 = sphi 0, %s200
      %s202 = sphi 0, %s200
      %s203 = sphi 0, %s202
      %s217 = sphi 0, %s203
      %s223 = sphi 0, %s225
      %s226 = sphi 0, %s223
      %s227 = sphi 0, %s226
      %s243 = sphi 0, %s227
    $region4: #{prism_decoder_forward.2} parent=1 // loop_header_branch
      %22 = sbr.rel (%p20) target = $region8
    $region5: #{prism_decoder_forward.2} parent=1 // loop_body
      %s24 = ssub.s32 %s19, 1
      %s25 = ssub.s32 %s19, 2
      %s26 = sadd.s32 %s19, 1
      %s27 = ssub.s32 %s19, %s26
      %p28 = scmp.eq.s32.totalorder %s27, 0
      %s30 = sadd.s32 %s29, 1
      %s31 = scalar_select %p28, %s29, %s30
      %p34 = pneg %p28
      %p35 = scmp.eq.s32.totalorder %s19, 1
      %p36 = por %p34, %p35
      %p37 = scmp.ne.s32.totalorder %s29, %s32
      %p38 = scmp.eq.s32.totalorder %s19, 0
      %p39 = por %p37, %p38
      %p40 = scmp.ne.s32.totalorder %s29, %s32
      %p41 = scmp.eq.s32.totalorder %s24, 1
      %p42 = por %p40, %p41
      %p43 = scmp.ne.s32.totalorder %s32, %s33
      %p44 = scmp.eq.s32.totalorder %s24, 0
      %p45 = por %p43, %p44
      %p46 = scmp.ne.s32.totalorder %s32, %s33
      %p47 = scmp.eq.s32.totalorder %s25, 1
      %p48 = por %p46, %p47
      %p50 = scmp.ne.s32.totalorder %s33, %s49
      %p51 = scmp.eq.s32.totalorder %s25, 0
      %p52 = por %p50, %p51
      %s54 = sadd.s32 %s53, 1
      %p57 = scmp.eq.s32.totalorder %s19, 1
      %p58 = scmp.ne.s32.totalorder %s53, %s55
      %p59 = scmp.eq.s32.totalorder %s19, 0
      %p60 = por %p58, %p59
      %p61 = scmp.ne.s32.totalorder %s53, %s55
      %p62 = scmp.eq.s32.totalorder %s24, 1
      %p63 = por %p61, %p62
      %p64 = scmp.ne.s32.totalorder %s55, %s56
      %p65 = scmp.eq.s32.totalorder %s24, 0
      %p66 = por %p64, %p65
      %p67 = scmp.ne.s32.totalorder %s55, %s56
      %p68 = scmp.eq.s32.totalorder %s25, 1
      %p69 = por %p67, %p68
      %p71 = scmp.ne.s32.totalorder %s56, %s70
      %p72 = scmp.eq.s32.totalorder %s25, 0
      %p73 = por %p71, %p72
      %s75 = sadd.s32 %s74, 1
      %p78 = scmp.eq.s32.totalorder %s19, 1
      %p79 = scmp.ne.s32.totalorder %s74, %s76
      %p80 = scmp.eq.s32.totalorder %s19, 0
      %p81 = por %p79, %p80
      %p82 = scmp.ne.s32.totalorder %s74, %s76
      %p83 = scmp.eq.s32.totalorder %s24, 1
      %p84 = por %p82, %p83
      %p85 = scmp.ne.s32.totalorder %s76, %s77
      %p86 = scmp.eq.s32.totalorder %s24, 0
      %p87 = por %p85, %p86
      %p88 = scmp.ne.s32.totalorder %s76, %s77
      %p89 = scmp.eq.s32.totalorder %s25, 1
      %p90 = por %p88, %p89
      %p92 = scmp.ne.s32.totalorder %s77, %s91
      %p93 = scmp.eq.s32.totalorder %s25, 0
      %p94 = por %p92, %p93
      %s96 = sadd.s32 %s95, 1
      %p99 = scmp.eq.s32.totalorder %s19, 1
      %p100 = scmp.ne.s32.totalorder %s95, %s97
      %p101 = scmp.eq.s32.totalorder %s19, 0
      %p102 = por %p100, %p101
      %p103 = scmp.ne.s32.totalorder %s95, %s97
      %p104 = scmp.eq.s32.totalorder %s24, 1
      %p105 = por %p103, %p104
      %p106 = scmp.ne.s32.totalorder %s97, %s98
      %p107 = scmp.eq.s32.totalorder %s24, 0
      %p108 = por %p106, %p107
      %p109 = scmp.ne.s32.totalorder %s97, %s98
      %p110 = scmp.eq.s32.totalorder %s25, 1
      %p111 = por %p109, %p110
      %p113 = scmp.ne.s32.totalorder %s98, %s112
      %p114 = scmp.eq.s32.totalorder %s25, 0
      %p115 = por %p113, %p114
      %s117 = sadd.s32 %s116, 1
      %p120 = scmp.eq.s32.totalorder %s19, 1
      %p121 = scmp.ne.s32.totalorder %s116, %s118
      %p122 = scmp.eq.s32.totalorder %s19, 0
      %p123 = por %p121, %p122
      %p124 = scmp.ne.s32.totalorder %s116, %s118
      %p125 = scmp.eq.s32.totalorder %s24, 1
      %p126 = por %p124, %p125
      %p127 = scmp.ne.s32.totalorder %s118, %s119
      %p128 = scmp.eq.s32.totalorder %s24, 0
      %p129 = por %p127, %p128
      %p130 = scmp.ne.s32.totalorder %s118, %s119
      %p131 = scmp.eq.s32.totalorder %s25, 1
      %p132 = por %p130, %p131
      %p134 = scmp.ne.s32.totalorder %s119, %s133
      %p135 = scmp.eq.s32.totalorder %s25, 0
      %p136 = por %p134, %p135
      %s138 = sadd.s32 %s137, 1
      %p141 = scmp.eq.s32.totalorder %s19, 1
      %p142 = scmp.ne.s32.totalorder %s137, %s139
      %p143 = scmp.eq.s32.totalorder %s19, 0
      %p144 = por %p142, %p143
      %p145 = scmp.ne.s32.totalorder %s137, %s139
      %p146 = scmp.eq.s32.totalorder %s24, 1
      %p147 = por %p145, %p146
      %p148 = scmp.ne.s32.totalorder %s139, %s140
      %p149 = scmp.eq.s32.totalorder %s24, 0
      %p150 = por %p148, %p149
      %p151 = scmp.ne.s32.totalorder %s139, %s140
      %p152 = scmp.eq.s32.totalorder %s25, 1
      %p153 = por %p151, %p152
      %p155 = scmp.ne.s32.totalorder %s140, %s154
      %p156 = scmp.eq.s32.totalorder %s25, 0
      %p157 = por %p155, %p156
      %s159 = sadd.s32 %s158, 1
      %p162 = scmp.eq.s32.totalorder %s19, 1
      %p163 = scmp.ne.s32.totalorder %s158, %s160
      %p164 = scmp.eq.s32.totalorder %s19, 0
      %p165 = por %p163, %p164
      %p166 = scmp.ne.s32.totalorder %s158, %s160
      %p167 = scmp.eq.s32.totalorder %s24, 1
      %p168 = por %p166, %p167
      %p169 = scmp.ne.s32.totalorder %s160, %s161
      %p170 = scmp.eq.s32.totalorder %s24, 0
      %p171 = por %p169, %p170
      %p172 = scmp.ne.s32.totalorder %s160, %s161
      %p173 = scmp.eq.s32.totalorder %s25, 1
      %p174 = por %p172, %p173
      %p176 = scmp.ne.s32.totalorder %s161, %s175
      %p177 = scmp.eq.s32.totalorder %s25, 0
      %p178 = por %p176, %p177
      %s180 = sadd.s32 %s179, 1
      %p183 = scmp.eq.s32.totalorder %s19, 1
      %p184 = scmp.ne.s32.totalorder %s179, %s181
      %p185 = scmp.eq.s32.totalorder %s19, 0
      %p186 = por %p184, %p185
      %p187 = scmp.ne.s32.totalorder %s179, %s181
      %p188 = scmp.eq.s32.totalorder %s24, 1
      %p189 = por %p187, %p188
      %p190 = scmp.ne.s32.totalorder %s181, %s182
      %p191 = scmp.eq.s32.totalorder %s24, 0
      %p192 = por %p190, %p191
      %p193 = scmp.ne.s32.totalorder %s181, %s182
      %p194 = scmp.eq.s32.totalorder %s25, 1
      %p195 = por %p193, %p194
      %p197 = scmp.ne.s32.totalorder %s182, %s196
      %p198 = scmp.eq.s32.totalorder %s25, 0
      %p199 = por %p197, %p198
      %s201 = sadd.s32 %s200, 1
      %p204 = scmp.eq.s32.totalorder %s19, 1
      %p205 = scmp.ne.s32.totalorder %s200, %s202
      %p206 = scmp.eq.s32.totalorder %s19, 0
      %p207 = por %p205, %p206
      %p208 = scmp.ne.s32.totalorder %s200, %s202
      %p209 = scmp.eq.s32.totalorder %s24, 1
      %p210 = por %p208, %p209
      %p211 = scmp.ne.s32.totalorder %s202, %s203
      %p212 = scmp.eq.s32.totalorder %s24, 0
      %p213 = por %p211, %p212
      %p214 = scmp.ne.s32.totalorder %s202, %s203
      %p215 = scmp.eq.s32.totalorder %s25, 1
      %p216 = por %p214, %p215
      %p218 = scmp.ne.s32.totalorder %s203, %s217
      %p219 = scmp.eq.s32.totalorder %s25, 0
      %p220 = por %p218, %p219
      %s221 = ssub.s32 %s19, %s26
      %p222 = scmp.eq.s32.totalorder %s221, 0
      %s224 = sadd.s32 %s223, 1
      %s225 = scalar_select %p222, %s223, %s224
      %p228 = pneg %p222
      %p229 = scmp.eq.s32.totalorder %s19, 1
      %p230 = por %p228, %p229
      %p231 = scmp.ne.s32.totalorder %s223, %s226
      %p232 = scmp.eq.s32.totalorder %s19, 0
      %p233 = por %p231, %p232
      %p234 = scmp.ne.s32.totalorder %s223, %s226
      %p235 = scmp.eq.s32.totalorder %s24, 1
      %p236 = por %p234, %p235
      %p237 = scmp.ne.s32.totalorder %s226, %s227
      %p238 = scmp.eq.s32.totalorder %s24, 0
      %p239 = por %p237, %p238
      %p240 = scmp.ne.s32.totalorder %s226, %s227
      %p241 = scmp.eq.s32.totalorder %s25, 1
      %p242 = por %p240, %p241
      %p244 = scmp.ne.s32.totalorder %s227, %s243
      %p245 = scmp.eq.s32.totalorder %s25, 0
      %p246 = por %p244, %p245
      %p247 = scmp.le.s32.totalorder 1, %s19
      %p248 = scmp.lt.s32.totalorder %s19, 3
      %p249 = pnand %p247, %p248
      %p250 = pneg %p249
      // Predicated region
      $region9: #{prism_decoder_forward.2} parent=5 // pred_check
        _
      $region10: #{prism_decoder_forward.2} parent=5 // pred_check_branch
        %252 = sbr.rel (%p249) target = $region12
      $region11: #{prism_decoder_forward.2} parent=5 // pred_region
        %s253 = ssub.s32 %s19, 1
        // Predicated region
        $region13: #{prism_decoder_forward.2} parent=11 // pred_check
          %p254 = pneg %p66
        $region14: #{prism_decoder_forward.2} parent=11 // pred_check_branch
          %256 = sbr.rel (%p254) target = $region16
        $region15: #{prism_decoder_forward.2} parent=11 // pred_region
          _
        $region16: #{prism_decoder_forward.2} parent=11 // pred_fallthru
          _
        // Predicated region
        $region17: #{prism_decoder_forward.2} parent=11 // pred_check
          %p257 = pneg %p87
        $region18: #{prism_decoder_forward.2} parent=11 // pred_check_branch
          %259 = sbr.rel (%p257) target = $region20
        $region19: #{prism_decoder_forward.2} parent=11 // pred_region
          _
        $region20: #{prism_decoder_forward.2} parent=11 // pred_fallthru
          _
        // Predicated region
        $region21: #{prism_decoder_forward.2} parent=11 // pred_check
          %p260 = pneg %p108
        $region22: #{prism_decoder_forward.2} parent=11 // pred_check_branch
          %262 = sbr.rel (%p260) target = $region24
        $region23: #{prism_decoder_forward.2} parent=11 // pred_region
          _
        $region24: #{prism_decoder_forward.2} parent=11 // pred_fallthru
          _
        // Predicated region
        $region25: #{prism_decoder_forward.2} parent=11 // pred_check
          %p263 = pneg %p129
        $region26: #{prism_decoder_forward.2} parent=11 // pred_check_branch
          %265 = sbr.rel (%p263) target = $region28
        $region27: #{prism_decoder_forward.2} parent=11 // pred_region
          _
        $region28: #{prism_decoder_forward.2} parent=11 // pred_fallthru
          _
        // Predicated region
        $region29: #{prism_decoder_forward.2} parent=11 // pred_check
          %p266 = pneg %p150
        $region30: #{prism_decoder_forward.2} parent=11 // pred_check_branch
          %268 = sbr.rel (%p266) target = $region32
        $region31: #{prism_decoder_forward.2} parent=11 // pred_region
          %s270 = ssub.s32 1024, 1024
          %271 = vsyncadd [#allocation5], %s270
          %s272 = sshll.u32 [#allocation4], 4
          %s273 = int_to_ptr.vmem [resolvable:$true] %s272
          %278 = dma.hbm_to_vmem [thread:$0]  %s5, 1024, %s273, [#allocation5], 64, 64, 4
        $region32: #{prism_decoder_forward.2} parent=11 // pred_fallthru
          _
        // Predicated region
        $region33: #{prism_decoder_forward.2} parent=11 // pred_check
          %p279 = pneg %p171
        $region34: #{prism_decoder_forward.2} parent=11 // pred_check_branch
          %281 = sbr.rel (%p279) target = $region36
        $region35: #{prism_decoder_forward.2} parent=11 // pred_region
          _
        $region36: #{prism_decoder_forward.2} parent=11 // pred_fallthru
          _
        // Predicated region
        $region37: #{prism_decoder_forward.2} parent=11 // pred_check
          %p282 = pneg %p192
        $region38: #{prism_decoder_forward.2} parent=11 // pred_check_branch
          %284 = sbr.rel (%p282) target = $region40
        $region39: #{prism_decoder_forward.2} parent=11 // pred_region
          %s286 = ssub.s32 1024, 1024
          %287 = vsyncadd [#allocation5], %s286
          %s288 = sshll.u32 [#allocation6], 4
          %s289 = int_to_ptr.vmem [resolvable:$true] %s288
          %294 = dma.hbm_to_vmem [thread:$0]  %s7, 1024, %s289, [#allocation5], 64, 64, 4
        $region40: #{prism_decoder_forward.2} parent=11 // pred_fallthru
          _
        // Predicated region
        $region41: #{prism_decoder_forward.2} parent=11 // pred_check
          %p295 = pneg %p213
        $region42: #{prism_decoder_forward.2} parent=11 // pred_check_branch
          %297 = sbr.rel (%p295) target = $region44
        $region43: #{prism_decoder_forward.2} parent=11 // pred_region
          _
        $region44: #{prism_decoder_forward.2} parent=11 // pred_fallthru
          _
      $region12: #{prism_decoder_forward.2} parent=5 // pred_fallthru
        _
      %p298 = scmp.lt.s32.totalorder %s19, 2
      // Predicated region
      $region45: #{prism_decoder_forward.2} parent=5 // pred_check
        %p299 = pneg %p298
      $region46: #{prism_decoder_forward.2} parent=5 // pred_check_branch
        %301 = sbr.rel (%p299) target = $region48
      $region47: #{prism_decoder_forward.2} parent=5 // pred_region
        // Predicated region
        $region49: #{prism_decoder_forward.2} parent=47 // pred_check
          %p302 = pneg %p39
        $region50: #{prism_decoder_forward.2} parent=47 // pred_check_branch
          %304 = sbr.rel (%p302) target = $region52
        $region51: #{prism_decoder_forward.2} parent=47 // pred_region
          %s305 = sand.u32 %s29, 1
          %s306 = scalar_lea.sflag [#allocation3], %s305
          %s307 = sand.u32 %s29, 1
          %s308 = smul.addr %s307, 32
          %s309 = scalar_lea.vmem [#allocation2], %s308
          %s310 = smul.u32 4, %s19
          %s312 = ssub.s32 512, 512
          %313 = vsyncadd %s306, %s312
          %s314 = smul.addr %s310, 128
          %s315 = scalar_lea.hbm %s0, %s314
          %s316 = sshll.u32 %s309, 4
          %s317 = int_to_ptr.vmem [resolvable:$true] %s316
          %322 = dma.hbm_to_vmem [thread:$0]  %s315, 512, %s317, %s306, 128, 128, 8
        $region52: #{prism_decoder_forward.2} parent=47 // pred_fallthru
          _
      $region48: #{prism_decoder_forward.2} parent=5 // pred_fallthru
        _
      %p323 = scmp.le.s32.totalorder 1, %s19
      %p324 = scmp.lt.s32.totalorder %s19, 3
      %p325 = pnand %p323, %p324
      %p326 = pneg %p325
      // Predicated region
      $region53: #{prism_decoder_forward.2} parent=5 // pred_check
        _
      $region54: #{prism_decoder_forward.2} parent=5 // pred_check_branch
        %328 = sbr.rel (%p325) target = $region56
      $region55: #{prism_decoder_forward.2} parent=5 // pred_region
        %s329 = ssub.s32 %s19, 1
        %s330 = sand.u32 %s32, 1
        %s331 = scalar_lea.sflag [#allocation3], %s330
        %s332 = sand.u32 %s32, 1
        %s333 = smul.addr %s332, 32
        %s334 = scalar_lea.vmem [#allocation2], %s333
        // Predicated region
        $region57: #{prism_decoder_forward.2} parent=55 // pred_check
          %p335 = pneg %p45
        $region58: #{prism_decoder_forward.2} parent=55 // pred_check_branch
          %337 = sbr.rel (%p335) target = $region60
        $region59: #{prism_decoder_forward.2} parent=55 // pred_region
          %338 = dma.done %s331, 512
        $region60: #{prism_decoder_forward.2} parent=55 // pred_fallthru
          _
        // Predicated region
        $region61: #{prism_decoder_forward.2} parent=55 // pred_check
          %p339 = pneg %p150
        $region62: #{prism_decoder_forward.2} parent=55 // pred_check_branch
          %341 = sbr.rel (%p339) target = $region64
        $region63: #{prism_decoder_forward.2} parent=55 // pred_region
          %342 = dma.done [#allocation5], 1024
        $region64: #{prism_decoder_forward.2} parent=55 // pred_fallthru
          _
        // Predicated region
        $region65: #{prism_decoder_forward.2} parent=55 // pred_check
          %p343 = pneg %p192
        $region66: #{prism_decoder_forward.2} parent=55 // pred_check_branch
          %345 = sbr.rel (%p343) target = $region68
        $region67: #{prism_decoder_forward.2} parent=55 // pred_region
          %346 = dma.done [#allocation5], 1024
        $region68: #{prism_decoder_forward.2} parent=55 // pred_fallthru
          _
        %s347 = sand.u32 %s32, 1
        %s348 = scalar_lea.sflag [#allocation3], %s347
        %s349 = sand.u32 %s32, 1
        %s350 = smul.addr %s349, 32
        %s351 = scalar_lea.vmem [#allocation2], %s350
        %p352 = pneg %p45
        %p353 = pneg %p42
        %p354 = pneg %p66
        %p355 = pneg %p63
        %p356 = pneg %p87
        %p357 = pneg %p84
        %p358 = pneg %p108
        %p359 = pneg %p105
        %p360 = pneg %p129
        %p361 = pneg %p126
        %p362 = pneg %p150
        %p363 = pneg %p147
        %p364 = pneg %p171
        %p365 = pneg %p168
        %p366 = pneg %p192
        %p367 = pneg %p189
        %p368 = pneg %p213
        %p369 = pneg %p210
        %p370 = pneg %p239
        %p371 = pneg %p236
        %s372 = smul.u32 4, %s24
        %p373 = scmp.lt.s32.totalorder %s372, 7
        %s374 = scalar_select %p373, %s372, 7
        %s375 = smul.addr %s374, 4
        %s376 = scalar_lea.vmem %s9, %s375
        %s377 = smul.u32 4, %s24
        %s378 = smul.u32 4, %s24
        %p379 = scmp.lt.s32.totalorder %s378, 7
        %s380 = scalar_select %p379, %s378, 7
        %s381 = smul.addr %s380, 4
        %s382 = scalar_lea.vmem %s9, %s381
        %s383 = smul.u32 4, %s24
        %v385 = vld [vmem:[%s334] sm:$0xff]
        %v386 = vld [vmem:[%s334 + $0x8] sm:$0xff]
        %v387 = vld [vmem:[%s334 + $0x10] sm:$0xff]
        %v388 = vld [vmem:[%s334 + $0x18] sm:$0xff]
        %v389 = vpack.c.bf16 %v386, %v385
        %v390 = vpack.c.bf16 %v388, %v387
        %v391 = vld [vmem:[%s1] sm:$0xf]
        %v392 = vld [vmem:[%s1 + $0x4] sm:$0xf]
        %v393 = vld [vmem:[%s1 + $0x8] sm:$0xf]
        %v394 = vld [vmem:[%s1 + $0xc] sm:$0xf]
        %v395 = vld [vmem:[%s1 + $0x10] sm:$0xf]
        %v396 = vld [vmem:[%s1 + $0x14] sm:$0xf]
        %v397 = vld [vmem:[%s1 + $0x18] sm:$0xf]
        %v398 = vld [vmem:[%s1 + $0x1c] sm:$0xf]
        %v399 = vld [vmem:[%s2] sm:$0x1]
        %v401 = vlaneseq
        %v402 = vshrl.u32 %v401, 7
        %v403 = vsub.s32 0, %v402
        %v404 = vrot.slane %v399, %v403
        %v414 = vunpack.c.l.b16 %v391
        %v415 = vunpack.c.l.b16 %v392
        %v416 = vunpack.c.l.b16 %v393
        %v417 = vunpack.c.l.b16 %v394
        %v418 = vunpack.c.l.b16 %v395
        %v419 = vunpack.c.l.b16 %v396
        %v420 = vunpack.c.l.b16 %v397
        %v421 = vunpack.c.l.b16 %v398
        %v422 = vpack.c.b16 %v415, %v414
        %v423 = vpack.c.b16 %v417, %v416
        %v424 = vpack.c.b16 %v419, %v418
        %v425 = vpack.c.b16 %v421, %v420
        %vm430 = vcmask 523264
        %v432 = vsel %vm430, %v389, 0
        %v435 = vsel %vm430, %v390, 0
        %437 = vmatprep.subr.bf16.mxu0 0
        %438 = vmatpush1.bf16.msra.mxu0 %v422
        %439 = vmatprep.subr.bf16.mxu0 0
        %440 = vmatpush1.bf16.msra.mxu0 %v423
        %441 = vmatprep.subr.bf16.mxu0 0
        %442 = vmatpush1.bf16.msra.mxu0 %v424
        %443 = vmatprep.subr.bf16.mxu0 0
        %444 = vmatpush1.bf16.msra.mxu0 %v425
        %445 = vmatprep.subr.bf16.mxu0 0
        %446 = vmatpush1.bf16.msra.mxu0 0
        %447 = vmatprep.subr.bf16.mxu0 0
        %448 = vmatpush1.bf16.msra.mxu0 0
        %449 = vmatprep.subr.bf16.mxu0 0
        %450 = vmatpush1.bf16.msra.mxu0 0
        %451 = vmatprep.subr.bf16.mxu0 0
        %452 = vmatpush1.bf16.msra.mxu0 0
        %453 = vmatprep.subr.bf16.mxu0 0
        %454 = vmatpush1.bf16.msra.mxu0 0
        %455 = vmatprep.subr.bf16.mxu0 0
        %456 = vmatpush1.bf16.msra.mxu0 0
        %457 = vmatprep.subr.bf16.mxu0 0
        %458 = vmatpush1.bf16.msra.mxu0 0
        %459 = vmatprep.subr.bf16.mxu0 0
        %460 = vmatpush1.bf16.msra.mxu0 0
        %461 = vmatprep.subr.bf16.mxu0 0
        %462 = vmatpush1.bf16.msra.mxu0 0
        %463 = vmatprep.subr.bf16.mxu0 0
        %464 = vmatpush1.bf16.msra.mxu0 0
        %465 = vmatprep.subr.bf16.mxu0 0
        %466 = vmatpush1.bf16.msra.mxu0 0
        %467 = vmatprep.subr.bf16.mxu0 0
        %468 = vmatpush1.bf16.msra.mxu0 0
        %469 = vmatprep.mubr.bf16.mxu0 0
        %470 = vmatmul.mubr.bf16.gmra.mrb[0].mxu0 %v432
        %v471 = vpop.f32.mrb[0].mxu0
        %v472 = vadd.f32 %v404, %v471
        %v473 = vpop.f32.mrb[0].mxu0
        %v474 = vpop.f32.mrb[0].mxu0
        %v475 = vadd.f32 %v404, %v474
        %v476 = vpop.f32.mrb[0].mxu0
        %477 = vmatprep.mubr.bf16.mxu0 0
        %478 = vmatmul.mubr.bf16.gmra.mrb[0].mxu0 %v435
        %v479 = vpop.f32.mrb[0].mxu0
        %v480 = vadd.f32 %v404, %v479
        %v481 = vpop.f32.mrb[0].mxu0
        %v482 = vpop.f32.mrb[0].mxu0
        %v483 = vadd.f32 %v404, %v482
        %v484 = vpop.f32.mrb[0].mxu0
        %485 = vdwg.mxu0
        %v486 = vmax.f32 %v472, 0.0
        %v487 = vmax.f32 %v475, 0.0
        %v488 = vmax.f32 %v480, 0.0
        %v489 = vmax.f32 %v483, 0.0
        %v490 = vpack.c.bf16 %v487, %v486
        %v491 = vpack.c.bf16 %v489, %v488
        %v492 = vld [vmem:[%s3] sm:$0xf]
        %v493 = vld [vmem:[%s3 + $0x4] sm:$0xf]
        %v494 = vld [vmem:[%s3 + $0x8] sm:$0xf]
        %v495 = vld [vmem:[%s3 + $0xc] sm:$0xf]
        %v496 = vld [vmem:[%s3 + $0x10] sm:$0xf]
        %v497 = vld [vmem:[%s3 + $0x14] sm:$0xf]
        %v498 = vld [vmem:[%s3 + $0x18] sm:$0xf]
        %v499 = vld [vmem:[%s3 + $0x1c] sm:$0xf]
        %v500 = vld [vmem:[%s3 + $0x20] sm:$0xf]
        %v501 = vld [vmem:[%s3 + $0x24] sm:$0xf]
        %v502 = vld [vmem:[%s3 + $0x28] sm:$0xf]
        %v503 = vld [vmem:[%s3 + $0x2c] sm:$0xf]
        %v504 = vld [vmem:[%s3 + $0x30] sm:$0xf]
        %v505 = vld [vmem:[%s3 + $0x34] sm:$0xf]
        %v506 = vld [vmem:[%s3 + $0x38] sm:$0xf]
        %v507 = vld [vmem:[%s3 + $0x3c] sm:$0xf]
        %v508 = vld [vmem:[%s4] sm:$0x1]
        %v510 = vlaneseq
        %v511 = vshrl.u32 %v510, 7
        %v512 = vsub.s32 0, %v511
        %v513 = vrot.slane %v508, %v512
        %v531 = vunpack.c.l.b16 %v492
        %v532 = vunpack.c.l.b16 %v493
        %v533 = vunpack.c.l.b16 %v494
        %v534 = vunpack.c.l.b16 %v495
        %v535 = vunpack.c.l.b16 %v496
        %v536 = vunpack.c.l.b16 %v497
        %v537 = vunpack.c.l.b16 %v498
        %v538 = vunpack.c.l.b16 %v499
        %v539 = vunpack.c.l.b16 %v500
        %v540 = vunpack.c.l.b16 %v501
        %v541 = vunpack.c.l.b16 %v502
        %v542 = vunpack.c.l.b16 %v503
        %v543 = vunpack.c.l.b16 %v504
        %v544 = vunpack.c.l.b16 %v505
        %v545 = vunpack.c.l.b16 %v506
        %v546 = vunpack.c.l.b16 %v507
        %v547 = vpack.c.b16 %v532, %v531
        %v548 = vpack.c.b16 %v534, %v533
        %v549 = vpack.c.b16 %v536, %v535
        %v550 = vpack.c.b16 %v538, %v537
        %v551 = vpack.c.b16 %v540, %v539
        %v552 = vpack.c.b16 %v542, %v541
        %v553 = vpack.c.b16 %v544, %v543
        %v554 = vpack.c.b16 %v546, %v545
        %563 = vmatprep.subr.bf16.mxu0 0
        %564 = vmatpush1.bf16.msra.mxu0 %v547
        %565 = vmatprep.subr.bf16.mxu0 0
        %566 = vmatpush1.bf16.msra.mxu0 %v548
        %567 = vmatprep.subr.bf16.mxu0 0
        %568 = vmatpush1.bf16.msra.mxu0 %v549
        %569 = vmatprep.subr.bf16.mxu0 0
        %570 = vmatpush1.bf16.msra.mxu0 %v550
        %571 = vmatprep.subr.bf16.mxu0 0
        %572 = vmatpush1.bf16.msra.mxu0 %v551
        %573 = vmatprep.subr.bf16.mxu0 0
        %574 = vmatpush1.bf16.msra.mxu0 %v552
        %575 = vmatprep.subr.bf16.mxu0 0
        %576 = vmatpush1.bf16.msra.mxu0 %v553
        %577 = vmatprep.subr.bf16.mxu0 0
        %578 = vmatpush1.bf16.msra.mxu0 %v554
        %579 = vmatprep.subr.bf16.mxu0 0
        %580 = vmatpush1.bf16.msra.mxu0 0
        %581 = vmatprep.subr.bf16.mxu0 0
        %582 = vmatpush1.bf16.msra.mxu0 0
        %583 = vmatprep.subr.bf16.mxu0 0
        %584 = vmatpush1.bf16.msra.mxu0 0
        %585 = vmatprep.subr.bf16.mxu0 0
        %586 = vmatpush1.bf16.msra.mxu0 0
        %587 = vmatprep.subr.bf16.mxu0 0
        %588 = vmatpush1.bf16.msra.mxu0 0
        %589 = vmatprep.subr.bf16.mxu0 0
        %590 = vmatpush1.bf16.msra.mxu0 0
        %591 = vmatprep.subr.bf16.mxu0 0
        %592 = vmatpush1.bf16.msra.mxu0 0
        %593 = vmatprep.subr.bf16.mxu0 0
        %594 = vmatpush1.bf16.msra.mxu0 0
        %595 = vmatprep.mubr.bf16.mxu0 0
        %596 = vmatmul.mubr.bf16.gmra.mrb[0].mxu0 %v490
        %v597 = vpop.f32.mrb[0].mxu0
        %v598 = vadd.f32 %v513, %v597
        %v599 = vpop.f32.mrb[0].mxu0
        %v600 = vpop.f32.mrb[0].mxu0
        %v601 = vadd.f32 %v513, %v600
        %v602 = vpop.f32.mrb[0].mxu0
        %603 = vmatprep.mubr.bf16.mxu0 0
        %604 = vmatmul.mubr.bf16.gmra.mrb[0].mxu0 %v491
        %v605 = vpop.f32.mrb[0].mxu0
        %v606 = vadd.f32 %v513, %v605
        %v607 = vpop.f32.mrb[0].mxu0
        %v608 = vpop.f32.mrb[0].mxu0
        %v609 = vadd.f32 %v513, %v608
        %v610 = vpop.f32.mrb[0].mxu0
        %611 = vdwg.mxu0
        %v612 = vmax.f32 %v598, 0.0
        %v613 = vmax.f32 %v601, 0.0
        %v614 = vmax.f32 %v606, 0.0
        %v615 = vmax.f32 %v609, 0.0
        %v616 = vpack.c.bf16 %v613, %v612
        %v617 = vpack.c.bf16 %v615, %v614
        %v618 = vld [vmem:[#allocation4] sm:$0xf]
        %v619 = vld [vmem:[#allocation4 + $0x4] sm:$0xf]
        %v620 = vld [vmem:[#allocation4 + $0x8] sm:$0xf]
        %v621 = vld [vmem:[#allocation4 + $0xc] sm:$0xf]
        %v622 = vld [vmem:[#allocation4 + $0x10] sm:$0xf]
        %v623 = vld [vmem:[#allocation4 + $0x14] sm:$0xf]
        %v624 = vld [vmem:[#allocation4 + $0x18] sm:$0xf]
        %v625 = vld [vmem:[#allocation4 + $0x1c] sm:$0xf]
        %v626 = vld [vmem:[#allocation4 + $0x20] sm:$0xf]
        %v627 = vld [vmem:[#allocation4 + $0x24] sm:$0xf]
        %v628 = vld [vmem:[#allocation4 + $0x28] sm:$0xf]
        %v629 = vld [vmem:[#allocation4 + $0x2c] sm:$0xf]
        %v630 = vld [vmem:[#allocation4 + $0x30] sm:$0xf]
        %v631 = vld [vmem:[#allocation4 + $0x34] sm:$0xf]
        %v632 = vld [vmem:[#allocation4 + $0x38] sm:$0xf]
        %v633 = vld [vmem:[#allocation4 + $0x3c] sm:$0xf]
        %v634 = vld [vmem:[%s6] sm:$0x1]
        %v636 = vlaneseq
        %v637 = vshrl.u32 %v636, 7
        %v638 = vsub.s32 0, %v637
        %v639 = vrot.slane %v634, %v638
        %v657 = vunpack.c.l.b16 %v618
        %v658 = vunpack.c.l.b16 %v619
        %v659 = vunpack.c.l.b16 %v620
        %v660 = vunpack.c.l.b16 %v621
        %v661 = vunpack.c.l.b16 %v622
        %v662 = vunpack.c.l.b16 %v623
        %v663 = vunpack.c.l.b16 %v624
        %v664 = vunpack.c.l.b16 %v625
        %v665 = vunpack.c.l.b16 %v626
        %v666 = vunpack.c.l.b16 %v627
        %v667 = vunpack.c.l.b16 %v628
        %v668 = vunpack.c.l.b16 %v629
        %v669 = vunpack.c.l.b16 %v630
        %v670 = vunpack.c.l.b16 %v631
        %v671 = vunpack.c.l.b16 %v632
        %v672 = vunpack.c.l.b16 %v633
        %v673 = vpack.c.b16 %v658, %v657
        %v674 = vpack.c.b16 %v660, %v659
        %v675 = vpack.c.b16 %v662, %v661
        %v676 = vpack.c.b16 %v664, %v663
        %v677 = vpack.c.b16 %v666, %v665
        %v678 = vpack.c.b16 %v668, %v667
        %v679 = vpack.c.b16 %v670, %v669
        %v680 = vpack.c.b16 %v672, %v671
        %689 = vmatprep.subr.bf16.mxu0 0
        %690 = vmatpush1.bf16.msra.mxu0 %v673
        %691 = vmatprep.subr.bf16.mxu0 0
        %692 = vmatpush1.bf16.msra.mxu0 %v674
        %693 = vmatprep.subr.bf16.mxu0 0
        %694 = vmatpush1.bf16.msra.mxu0 %v675
        %695 = vmatprep.subr.bf16.mxu0 0
        %696 = vmatpush1.bf16.msra.mxu0 %v676
        %697 = vmatprep.subr.bf16.mxu0 0
        %698 = vmatpush1.bf16.msra.mxu0 %v677
        %699 = vmatprep.subr.bf16.mxu0 0
        %700 = vmatpush1.bf16.msra.mxu0 %v678
        %701 = vmatprep.subr.bf16.mxu0 0
        %702 = vmatpush1.bf16.msra.mxu0 %v679
        %703 = vmatprep.subr.bf16.mxu0 0
        %704 = vmatpush1.bf16.msra.mxu0 %v680
        %705 = vmatprep.subr.bf16.mxu0 0
        %706 = vmatpush1.bf16.msra.mxu0 0
        %707 = vmatprep.subr.bf16.mxu0 0
        %708 = vmatpush1.bf16.msra.mxu0 0
        %709 = vmatprep.subr.bf16.mxu0 0
        %710 = vmatpush1.bf16.msra.mxu0 0
        %711 = vmatprep.subr.bf16.mxu0 0
        %712 = vmatpush1.bf16.msra.mxu0 0
        %713 = vmatprep.subr.bf16.mxu0 0
        %714 = vmatpush1.bf16.msra.mxu0 0
        %715 = vmatprep.subr.bf16.mxu0 0
        %716 = vmatpush1.bf16.msra.mxu0 0
        %717 = vmatprep.subr.bf16.mxu0 0
        %718 = vmatpush1.bf16.msra.mxu0 0
        %719 = vmatprep.subr.bf16.mxu0 0
        %720 = vmatpush1.bf16.msra.mxu0 0
        %721 = vmatprep.mubr.bf16.mxu0 0
        %722 = vmatmul.mubr.bf16.gmra.mrb[0].mxu0 %v616
        %v723 = vpop.f32.mrb[0].mxu0
        %v724 = vadd.f32 %v639, %v723
        %v725 = vpop.f32.mrb[0].mxu0
        %v726 = vpop.f32.mrb[0].mxu0
        %v727 = vadd.f32 %v639, %v726
        %v728 = vpop.f32.mrb[0].mxu0
        %729 = vmatprep.mubr.bf16.mxu0 0
        %730 = vmatmul.mubr.bf16.gmra.mrb[0].mxu0 %v617
        %v731 = vpop.f32.mrb[0].mxu0
        %v732 = vadd.f32 %v639, %v731
        %v733 = vpop.f32.mrb[0].mxu0
        %v734 = vpop.f32.mrb[0].mxu0
        %v735 = vadd.f32 %v639, %v734
        %v736 = vpop.f32.mrb[0].mxu0
        %737 = vdwg.mxu0
        %v738 = vmax.f32 %v724, 0.0
        %v739 = vmax.f32 %v727, 0.0
        %v740 = vmax.f32 %v732, 0.0
        %v741 = vmax.f32 %v735, 0.0
        %v742 = vpack.c.bf16 %v739, %v738
        %v743 = vpack.c.bf16 %v741, %v740
        %v744 = vld [vmem:[#allocation6] sm:$0xf]
        %v745 = vld [vmem:[#allocation6 + $0x4] sm:$0xf]
        %v746 = vld [vmem:[#allocation6 + $0x8] sm:$0xf]
        %v747 = vld [vmem:[#allocation6 + $0xc] sm:$0xf]
        %v748 = vld [vmem:[#allocation6 + $0x10] sm:$0xf]
        %v749 = vld [vmem:[#allocation6 + $0x14] sm:$0xf]
        %v750 = vld [vmem:[#allocation6 + $0x18] sm:$0xf]
        %v751 = vld [vmem:[#allocation6 + $0x1c] sm:$0xf]
        %v752 = vld [vmem:[#allocation6 + $0x20] sm:$0xf]
        %v753 = vld [vmem:[#allocation6 + $0x24] sm:$0xf]
        %v754 = vld [vmem:[#allocation6 + $0x28] sm:$0xf]
        %v755 = vld [vmem:[#allocation6 + $0x2c] sm:$0xf]
        %v756 = vld [vmem:[#allocation6 + $0x30] sm:$0xf]
        %v757 = vld [vmem:[#allocation6 + $0x34] sm:$0xf]
        %v758 = vld [vmem:[#allocation6 + $0x38] sm:$0xf]
        %v759 = vld [vmem:[#allocation6 + $0x3c] sm:$0xf]
        %v760 = vld [vmem:[%s8] sm:$0x1]
        %v762 = vlaneseq
        %v763 = vshrl.u32 %v762, 7
        %v764 = vsub.s32 0, %v763
        %v765 = vrot.slane %v760, %v764
        %v783 = vunpack.c.l.b16 %v744
        %v784 = vunpack.c.l.b16 %v745
        %v785 = vunpack.c.l.b16 %v746
        %v786 = vunpack.c.l.b16 %v747
        %v787 = vunpack.c.l.b16 %v748
        %v788 = vunpack.c.l.b16 %v749
        %v789 = vunpack.c.l.b16 %v750
        %v790 = vunpack.c.l.b16 %v751
        %v791 = vunpack.c.l.b16 %v752
        %v792 = vunpack.c.l.b16 %v753
        %v793 = vunpack.c.l.b16 %v754
        %v794 = vunpack.c.l.b16 %v755
        %v795 = vunpack.c.l.b16 %v756
        %v796 = vunpack.c.l.b16 %v757
        %v797 = vunpack.c.l.b16 %v758
        %v798 = vunpack.c.l.b16 %v759
        %v799 = vpack.c.b16 %v784, %v783
        %v800 = vpack.c.b16 %v786, %v785
        %v801 = vpack.c.b16 %v788, %v787
        %v802 = vpack.c.b16 %v790, %v789
        %v803 = vpack.c.b16 %v792, %v791
        %v804 = vpack.c.b16 %v794, %v793
        %v805 = vpack.c.b16 %v796, %v795
        %v806 = vpack.c.b16 %v798, %v797
        %815 = vmatprep.subr.bf16.mxu0 0
        %816 = vmatpush1.bf16.msra.mxu0 %v799
        %817 = vmatprep.subr.bf16.mxu0 0
        %818 = vmatpush1.bf16.msra.mxu0 %v800
        %819 = vmatprep.subr.bf16.mxu0 0
        %820 = vmatpush1.bf16.msra.mxu0 %v801
        %821 = vmatprep.subr.bf16.mxu0 0
        %822 = vmatpush1.bf16.msra.mxu0 %v802
        %823 = vmatprep.subr.bf16.mxu0 0
        %824 = vmatpush1.bf16.msra.mxu0 %v803
        %825 = vmatprep.subr.bf16.mxu0 0
        %826 = vmatpush1.bf16.msra.mxu0 %v804
        %827 = vmatprep.subr.bf16.mxu0 0
        %828 = vmatpush1.bf16.msra.mxu0 %v805
        %829 = vmatprep.subr.bf16.mxu0 0
        %830 = vmatpush1.bf16.msra.mxu0 %v806
        %831 = vmatprep.subr.bf16.mxu0 0
        %832 = vmatpush1.bf16.msra.mxu0 0
        %833 = vmatprep.subr.bf16.mxu0 0
        %834 = vmatpush1.bf16.msra.mxu0 0
        %835 = vmatprep.subr.bf16.mxu0 0
        %836 = vmatpush1.bf16.msra.mxu0 0
        %837 = vmatprep.subr.bf16.mxu0 0
        %838 = vmatpush1.bf16.msra.mxu0 0
        %839 = vmatprep.subr.bf16.mxu0 0
        %840 = vmatpush1.bf16.msra.mxu0 0
        %841 = vmatprep.subr.bf16.mxu0 0
        %842 = vmatpush1.bf16.msra.mxu0 0
        %843 = vmatprep.subr.bf16.mxu0 0
        %844 = vmatpush1.bf16.msra.mxu0 0
        %845 = vmatprep.subr.bf16.mxu0 0
        %846 = vmatpush1.bf16.msra.mxu0 0
        %847 = vmatprep.mubr.bf16.mxu0 0
        %848 = vmatmul.mubr.bf16.gmra.mrb[0].mxu0 %v742
        %v849 = vpop.f32.mrb[0].mxu0
        %v850 = vadd.f32 %v765, %v849
        %v851 = vpop.f32.mrb[0].mxu0
        %v852 = vpop.f32.mrb[0].mxu0
        %v853 = vadd.f32 %v765, %v852
        %v854 = vpop.f32.mrb[0].mxu0
        %855 = vmatprep.mubr.bf16.mxu0 0
        %856 = vmatmul.mubr.bf16.gmra.mrb[0].mxu0 %v743
        %v857 = vpop.f32.mrb[0].mxu0
        %v858 = vadd.f32 %v765, %v857
        %v859 = vpop.f32.mrb[0].mxu0
        %v860 = vpop.f32.mrb[0].mxu0
        %v861 = vadd.f32 %v765, %v860
        %v862 = vpop.f32.mrb[0].mxu0
        %863 = vdwg.mxu0
        %v864 = vpack.c.bf16 %v853, %v850
        %v865 = vpack.c.bf16 %v861, %v858
        %v868 = vunpack.c.l.b16 %v864
        %v869 = vunpack.c.h.b16 %v864
        %v870 = vunpack.c.l.b16 %v865
        %v871 = vunpack.c.h.b16 %v865
        %v872 = vpack.c.b16 %v868, %v868
        %v873 = vpack.c.b16 %v869, %v869
        %v874 = vpack.c.b16 %v870, %v870
        %v875 = vpack.c.b16 %v871, %v871
        %880 = vst [vmem:[%s382] sm:$0xf] %v872
        %881 = vst [vmem:[%s382 + $0x4] sm:$0xf] %v873
        %882 = vst [vmem:[%s382 + $0x8] sm:$0xf] %v874
        %883 = vst [vmem:[%s382 + $0xc] sm:$0xf] %v875
        %s884 = smul.u32 4, %s24
        %p885 = scmp.lt.s32.totalorder %s884, 7
        %s886 = scalar_select %p885, %s884, 7
        %s887 = smul.addr %s886, 4
        %s888 = scalar_lea.vmem %s9, %s887
        // Predicated region
        $region69: #{prism_decoder_forward.2} parent=55 // pred_check
          %p889 = pneg %p236
        $region70: #{prism_decoder_forward.2} parent=55 // pred_check_branch
          %891 = sbr.rel (%p889) target = $region72
        $region71: #{prism_decoder_forward.2} parent=55 // pred_region
          %s892 = smul.u32 4, %s24
        $region72: #{prism_decoder_forward.2} parent=55 // pred_fallthru
          _
      $region56: #{prism_decoder_forward.2} parent=5 // pred_fallthru
        _
      %p893 = scmp.le.s32.totalorder 2, %s19
      // Predicated region
      $region73: #{prism_decoder_forward.2} parent=5 // pred_check
        %p894 = pneg %p893
      $region74: #{prism_decoder_forward.2} parent=5 // pred_check_branch
        %896 = sbr.rel (%p894) target = $region76
      $region75: #{prism_decoder_forward.2} parent=5 // pred_region
        %s897 = ssub.s32 %s19, 2
        // Predicated region
        $region77: #{prism_decoder_forward.2} parent=75 // pred_check
          %p898 = pneg %p242
        $region78: #{prism_decoder_forward.2} parent=75 // pred_check_branch
          %900 = sbr.rel (%p898) target = $region80
        $region79: #{prism_decoder_forward.2} parent=75 // pred_region
          %s901 = smul.u32 4, %s25
          %p902 = scmp.lt.s32.totalorder %s901, 7
          %s903 = scalar_select %p902, %s901, 7
          %s904 = smul.addr %s903, 4
          %s905 = scalar_lea.vmem %s9, %s904
        $region80: #{prism_decoder_forward.2} parent=75 // pred_fallthru
          _
      $region76: #{prism_decoder_forward.2} parent=5 // pred_fallthru
        _
    $region6: #{prism_decoder_forward.2} parent=1 // loop_footer
      %s23 = sadd.s32 1, %s19
    $region7: #{prism_decoder_forward.2} parent=1 // loop_footer_branch
      %18 = sbr.rel target = $region3
    $region8: #{prism_decoder_forward.2} parent=1 // loop_exit
      _
    %906 = vsyncpa [#allocation3], 1
    %s907 = scalar_lea.sflag [#allocation3], 1
    %908 = vsyncpa %s907, 1
    %909 = vsyncpa [#allocation5], 1

// kernel: prism_decoder_forward.3
$region0: #{prism_decoder_forward.3}
  #allocation0 [shape = 'u32[]', space=smem, size = 0x4, offset = 0x4, fixed_abs, tag = 'smem constant byte address 0x4 - core index']
  #allocation1 [shape = 'u32[144,128]{1,0:T(1,128)}', space=vmem, size = 0x12000, scoped, tag = 'internal scratch']
  %s0 = inlined_call_operand.vmem [shape: bf16[96,128], index: 0, kind: input, shape index: {}]
  %s1 = inlined_call_operand.vmem [shape: bf16[128,128], index: 1, kind: input, shape index: {}]
  %s2 = inlined_call_operand.vmem [shape: f32[1,128], index: 2, kind: input, shape index: {}]
  %s3 = inlined_call_operand.vmem [shape: bf16[128,512], index: 3, kind: input, shape index: {}]
  %s4 = inlined_call_operand.vmem [shape: f32[1,512], index: 4, kind: input, shape index: {}]
  %s5 = inlined_call_operand.vmem [shape: bf16[512,256], index: 5, kind: input, shape index: {}]
  %s6 = inlined_call_operand.vmem [shape: f32[1,256], index: 6, kind: input, shape index: {}]
  %s7 = inlined_call_operand.vmem [shape: bf16[256,128], index: 7, kind: input, shape index: {}]
  %s8 = inlined_call_operand.vmem [shape: f32[1,128], index: 8, kind: input, shape index: {}]
  %s9 = inlined_call_operand.vmem [shape: bf16[128,128], index: 9, kind: input, shape index: {}]
  %s10 = inlined_call_operand.vmem [shape: f32[1,128], index: 10, kind: input, shape index: {}]
  %s11 = inlined_call_operand.vmem [shape: bf16[128,128], index: 11, kind: input, shape index: {}]
  %s12 = inlined_call_operand.vmem [shape: f32[1,128], index: 12, kind: input, shape index: {}]
  %s13 = inlined_call_operand.vmem [shape: f32[96,128], index: 13, kind: output, shape index: {}]
  %s14 = sld [smem:[#allocation0]]
  $region85: #{prism_decoder_forward.3} parent=0
    _
  %s16 = ssub.s32 1, %s14
  %s17 = scalar_select 0, %s16, %s14
  loop: start=0, step=1, limit=4
  $region2: #{prism_decoder_forward.3} parent=0 // loop_pre_header
    _
  $region3: #{prism_decoder_forward.3} parent=0 // loop_header
    %s19 = sphi 0, %s23
    %p20 = scmp.ge.s32.totalorder %s19, 4
    %s29 = sphi 0, %s31
    %s32 = sphi 0, %s29
    %s33 = sphi 0, %s32
    %s49 = sphi 0, %s33
    %s53 = sphi 0, %s53
    %s55 = sphi 0, %s53
    %s56 = sphi 0, %s55
    %s70 = sphi 0, %s56
    %s74 = sphi 0, %s74
    %s76 = sphi 0, %s74
    %s77 = sphi 0, %s76
    %s91 = sphi 0, %s77
    %s95 = sphi 0, %s95
    %s97 = sphi 0, %s95
    %s98 = sphi 0, %s97
    %s112 = sphi 0, %s98
    %s116 = sphi 0, %s116
    %s118 = sphi 0, %s116
    %s119 = sphi 0, %s118
    %s133 = sphi 0, %s119
    %s137 = sphi 0, %s137
    %s139 = sphi 0, %s137
    %s140 = sphi 0, %s139
    %s154 = sphi 0, %s140
    %s158 = sphi 0, %s158
    %s160 = sphi 0, %s158
    %s161 = sphi 0, %s160
    %s175 = sphi 0, %s161
    %s179 = sphi 0, %s179
    %s181 = sphi 0, %s179
    %s182 = sphi 0, %s181
    %s196 = sphi 0, %s182
    %s200 = sphi 0, %s200
    %s202 = sphi 0, %s200
    %s203 = sphi 0, %s202
    %s217 = sphi 0, %s203
    %s221 = sphi 0, %s221
    %s223 = sphi 0, %s221
    %s224 = sphi 0, %s223
    %s238 = sphi 0, %s224
    %s242 = sphi 0, %s242
    %s244 = sphi 0, %s242
    %s245 = sphi 0, %s244
    %s259 = sphi 0, %s245
    %s263 = sphi 0, %s263
    %s265 = sphi 0, %s263
    %s266 = sphi 0, %s265
    %s280 = sphi 0, %s266
    %s284 = sphi 0, %s284
    %s286 = sphi 0, %s284
    %s287 = sphi 0, %s286
    %s301 = sphi 0, %s287
    %s307 = sphi 0, %s309
    %s310 = sphi 0, %s307
    %s311 = sphi 0, %s310
    %s327 = sphi 0, %s311
  $region4: #{prism_decoder_forward.3} parent=0 // loop_header_branch
    %22 = sbr.rel (%p20) target = $region8
  $region5: #{prism_decoder_forward.3} parent=0 // loop_body
    %s24 = ssub.s32 %s19, 1
    %s25 = ssub.s32 %s19, 2
    %s26 = sadd.s32 %s19, 1
    %s27 = ssub.s32 %s19, %s26
    %p28 = scmp.eq.s32.totalorder %s27, 0
    %s30 = sadd.s32 %s29, 1
    %s31 = scalar_select %p28, %s29, %s30
    %p34 = pneg %p28
    %p35 = scmp.eq.s32.totalorder %s19, 1
    %p36 = por %p34, %p35
    %p37 = scmp.ne.s32.totalorder %s29, %s32
    %p38 = scmp.eq.s32.totalorder %s19, 0
    %p39 = por %p37, %p38
    %p40 = scmp.ne.s32.totalorder %s29, %s32
    %p41 = scmp.eq.s32.totalorder %s24, 1
    %p42 = por %p40, %p41
    %p43 = scmp.ne.s32.totalorder %s32, %s33
    %p44 = scmp.eq.s32.totalorder %s24, 0
    %p45 = por %p43, %p44
    %p46 = scmp.ne.s32.totalorder %s32, %s33
    %p47 = scmp.eq.s32.totalorder %s25, 1
    %p48 = por %p46, %p47
    %p50 = scmp.ne.s32.totalorder %s33, %s49
    %p51 = scmp.eq.s32.totalorder %s25, 0
    %p52 = por %p50, %p51
    %s54 = sadd.s32 %s53, 1
    %p57 = scmp.eq.s32.totalorder %s19, 1
    %p58 = scmp.ne.s32.totalorder %s53, %s55
    %p59 = scmp.eq.s32.totalorder %s19, 0
    %p60 = por %p58, %p59
    %p61 = scmp.ne.s32.totalorder %s53, %s55
    %p62 = scmp.eq.s32.totalorder %s24, 1
    %p63 = por %p61, %p62
    %p64 = scmp.ne.s32.totalorder %s55, %s56
    %p65 = scmp.eq.s32.totalorder %s24, 0
    %p66 = por %p64, %p65
    %p67 = scmp.ne.s32.totalorder %s55, %s56
    %p68 = scmp.eq.s32.totalorder %s25, 1
    %p69 = por %p67, %p68
    %p71 = scmp.ne.s32.totalorder %s56, %s70
    %p72 = scmp.eq.s32.totalorder %s25, 0
    %p73 = por %p71, %p72
    %s75 = sadd.s32 %s74, 1
    %p78 = scmp.eq.s32.totalorder %s19, 1
    %p79 = scmp.ne.s32.totalorder %s74, %s76
    %p80 = scmp.eq.s32.totalorder %s19, 0
    %p81 = por %p79, %p80
    %p82 = scmp.ne.s32.totalorder %s74, %s76
    %p83 = scmp.eq.s32.totalorder %s24, 1
    %p84 = por %p82, %p83
    %p85 = scmp.ne.s32.totalorder %s76, %s77
    %p86 = scmp.eq.s32.totalorder %s24, 0
    %p87 = por %p85, %p86
    %p88 = scmp.ne.s32.totalorder %s76, %s77
    %p89 = scmp.eq.s32.totalorder %s25, 1
    %p90 = por %p88, %p89
    %p92 = scmp.ne.s32.totalorder %s77, %s91
    %p93 = scmp.eq.s32.totalorder %s25, 0
    %p94 = por %p92, %p93
    %s96 = sadd.s32 %s95, 1
    %p99 = scmp.eq.s32.totalorder %s19, 1
    %p100 = scmp.ne.s32.totalorder %s95, %s97
    %p101 = scmp.eq.s32.totalorder %s19, 0
    %p102 = por %p100, %p101
    %p103 = scmp.ne.s32.totalorder %s95, %s97
    %p104 = scmp.eq.s32.totalorder %s24, 1
    %p105 = por %p103, %p104
    %p106 = scmp.ne.s32.totalorder %s97, %s98
    %p107 = scmp.eq.s32.totalorder %s24, 0
    %p108 = por %p106, %p107
    %p109 = scmp.ne.s32.totalorder %s97, %s98
    %p110 = scmp.eq.s32.totalorder %s25, 1
    %p111 = por %p109, %p110
    %p113 = scmp.ne.s32.totalorder %s98, %s112
    %p114 = scmp.eq.s32.totalorder %s25, 0
    %p115 = por %p113, %p114
    %s117 = sadd.s32 %s116, 1
    %p120 = scmp.eq.s32.totalorder %s19, 1
    %p121 = scmp.ne.s32.totalorder %s116, %s118
    %p122 = scmp.eq.s32.totalorder %s19, 0
    %p123 = por %p121, %p122
    %p124 = scmp.ne.s32.totalorder %s116, %s118
    %p125 = scmp.eq.s32.totalorder %s24, 1
    %p126 = por %p124, %p125
    %p127 = scmp.ne.s32.totalorder %s118, %s119
    %p128 = scmp.eq.s32.totalorder %s24, 0
    %p129 = por %p127, %p128
    %p130 = scmp.ne.s32.totalorder %s118, %s119
    %p131 = scmp.eq.s32.totalorder %s25, 1
    %p132 = por %p130, %p131
    %p134 = scmp.ne.s32.totalorder %s119, %s133
    %p135 = scmp.eq.s32.totalorder %s25, 0
    %p136 = por %p134, %p135
    %s138 = sadd.s32 %s137, 1
    %p141 = scmp.eq.s32.totalorder %s19, 1
    %p142 = scmp.ne.s32.totalorder %s137, %s139
    %p143 = scmp.eq.s32.totalorder %s19, 0
    %p144 = por %p142, %p143
    %p145 = scmp.ne.s32.totalorder %s137, %s139
    %p146 = scmp.eq.s32.totalorder %s24, 1
    %p147 = por %p145, %p146
    %p148 = scmp.ne.s32.totalorder %s139, %s140
    %p149 = scmp.eq.s32.totalorder %s24, 0
    %p150 = por %p148, %p149
    %p151 = scmp.ne.s32.totalorder %s139, %s140
    %p152 = scmp.eq.s32.totalorder %s25, 1
    %p153 = por %p151, %p152
    %p155 = scmp.ne.s32.totalorder %s140, %s154
    %p156 = scmp.eq.s32.totalorder %s25, 0
    %p157 = por %p155, %p156
    %s159 = sadd.s32 %s158, 1
    %p162 = scmp.eq.s32.totalorder %s19, 1
    %p163 = scmp.ne.s32.totalorder %s158, %s160
    %p164 = scmp.eq.s32.totalorder %s19, 0
    %p165 = por %p163, %p164
    %p166 = scmp.ne.s32.totalorder %s158, %s160
    %p167 = scmp.eq.s32.totalorder %s24, 1
    %p168 = por %p166, %p167
    %p169 = scmp.ne.s32.totalorder %s160, %s161
    %p170 = scmp.eq.s32.totalorder %s24, 0
    %p171 = por %p169, %p170
    %p172 = scmp.ne.s32.totalorder %s160, %s161
    %p173 = scmp.eq.s32.totalorder %s25, 1
    %p174 = por %p172, %p173
    %p176 = scmp.ne.s32.totalorder %s161, %s175
    %p177 = scmp.eq.s32.totalorder %s25, 0
    %p178 = por %p176, %p177
    %s180 = sadd.s32 %s179, 1
    %p183 = scmp.eq.s32.totalorder %s19, 1
    %p184 = scmp.ne.s32.totalorder %s179, %s181
    %p185 = scmp.eq.s32.totalorder %s19, 0
    %p186 = por %p184, %p185
    %p187 = scmp.ne.s32.totalorder %s179, %s181
    %p188 = scmp.eq.s32.totalorder %s24, 1
    %p189 = por %p187, %p188
    %p190 = scmp.ne.s32.totalorder %s181, %s182
    %p191 = scmp.eq.s32.totalorder %s24, 0
    %p192 = por %p190, %p191
    %p193 = scmp.ne.s32.totalorder %s181, %s182
    %p194 = scmp.eq.s32.totalorder %s25, 1
    %p195 = por %p193, %p194
    %p197 = scmp.ne.s32.totalorder %s182, %s196
    %p198 = scmp.eq.s32.totalorder %s25, 0
    %p199 = por %p197, %p198
    %s201 = sadd.s32 %s200, 1
    %p204 = scmp.eq.s32.totalorder %s19, 1
    %p205 = scmp.ne.s32.totalorder %s200, %s202
    %p206 = scmp.eq.s32.totalorder %s19, 0
    %p207 = por %p205, %p206
    %p208 = scmp.ne.s32.totalorder %s200, %s202
    %p209 = scmp.eq.s32.totalorder %s24, 1
    %p210 = por %p208, %p209
    %p211 = scmp.ne.s32.totalorder %s202, %s203
    %p212 = scmp.eq.s32.totalorder %s24, 0
    %p213 = por %p211, %p212
    %p214 = scmp.ne.s32.totalorder %s202, %s203
    %p215 = scmp.eq.s32.totalorder %s25, 1
    %p216 = por %p214, %p215
    %p218 = scmp.ne.s32.totalorder %s203, %s217
    %p219 = scmp.eq.s32.totalorder %s25, 0
    %p220 = por %p218, %p219
    %s222 = sadd.s32 %s221, 1
    %p225 = scmp.eq.s32.totalorder %s19, 1
    %p226 = scmp.ne.s32.totalorder %s221, %s223
    %p227 = scmp.eq.s32.totalorder %s19, 0
    %p228 = por %p226, %p227
    %p229 = scmp.ne.s32.totalorder %s221, %s223
    %p230 = scmp.eq.s32.totalorder %s24, 1
    %p231 = por %p229, %p230
    %p232 = scmp.ne.s32.totalorder %s223, %s224
    %p233 = scmp.eq.s32.totalorder %s24, 0
    %p234 = por %p232, %p233
    %p235 = scmp.ne.s32.totalorder %s223, %s224
    %p236 = scmp.eq.s32.totalorder %s25, 1
    %p237 = por %p235, %p236
    %p239 = scmp.ne.s32.totalorder %s224, %s238
    %p240 = scmp.eq.s32.totalorder %s25, 0
    %p241 = por %p239, %p240
    %s243 = sadd.s32 %s242, 1
    %p246 = scmp.eq.s32.totalorder %s19, 1
    %p247 = scmp.ne.s32.totalorder %s242, %s244
    %p248 = scmp.eq.s32.totalorder %s19, 0
    %p249 = por %p247, %p248
    %p250 = scmp.ne.s32.totalorder %s242, %s244
    %p251 = scmp.eq.s32.totalorder %s24, 1
    %p252 = por %p250, %p251
    %p253 = scmp.ne.s32.totalorder %s244, %s245
    %p254 = scmp.eq.s32.totalorder %s24, 0
    %p255 = por %p253, %p254
    %p256 = scmp.ne.s32.totalorder %s244, %s245
    %p257 = scmp.eq.s32.totalorder %s25, 1
    %p258 = por %p256, %p257
    %p260 = scmp.ne.s32.totalorder %s245, %s259
    %p261 = scmp.eq.s32.totalorder %s25, 0
    %p262 = por %p260, %p261
    %s264 = sadd.s32 %s263, 1
    %p267 = scmp.eq.s32.totalorder %s19, 1
    %p268 = scmp.ne.s32.totalorder %s263, %s265
    %p269 = scmp.eq.s32.totalorder %s19, 0
    %p270 = por %p268, %p269
    %p271 = scmp.ne.s32.totalorder %s263, %s265
    %p272 = scmp.eq.s32.totalorder %s24, 1
    %p273 = por %p271, %p272
    %p274 = scmp.ne.s32.totalorder %s265, %s266
    %p275 = scmp.eq.s32.totalorder %s24, 0
    %p276 = por %p274, %p275
    %p277 = scmp.ne.s32.totalorder %s265, %s266
    %p278 = scmp.eq.s32.totalorder %s25, 1
    %p279 = por %p277, %p278
    %p281 = scmp.ne.s32.totalorder %s266, %s280
    %p282 = scmp.eq.s32.totalorder %s25, 0
    %p283 = por %p281, %p282
    %s285 = sadd.s32 %s284, 1
    %p288 = scmp.eq.s32.totalorder %s19, 1
    %p289 = scmp.ne.s32.totalorder %s284, %s286
    %p290 = scmp.eq.s32.totalorder %s19, 0
    %p291 = por %p289, %p290
    %p292 = scmp.ne.s32.totalorder %s284, %s286
    %p293 = scmp.eq.s32.totalorder %s24, 1
    %p294 = por %p292, %p293
    %p295 = scmp.ne.s32.totalorder %s286, %s287
    %p296 = scmp.eq.s32.totalorder %s24, 0
    %p297 = por %p295, %p296
    %p298 = scmp.ne.s32.totalorder %s286, %s287
    %p299 = scmp.eq.s32.totalorder %s25, 1
    %p300 = por %p298, %p299
    %p302 = scmp.ne.s32.totalorder %s287, %s301
    %p303 = scmp.eq.s32.totalorder %s25, 0
    %p304 = por %p302, %p303
    %s305 = ssub.s32 %s19, %s26
    %p306 = scmp.eq.s32.totalorder %s305, 0
    %s308 = sadd.s32 %s307, 1
    %s309 = scalar_select %p306, %s307, %s308
    %p312 = pneg %p306
    %p313 = scmp.eq.s32.totalorder %s19, 1
    %p314 = por %p312, %p313
    %p315 = scmp.ne.s32.totalorder %s307, %s310
    %p316 = scmp.eq.s32.totalorder %s19, 0
    %p317 = por %p315, %p316
    %p318 = scmp.ne.s32.totalorder %s307, %s310
    %p319 = scmp.eq.s32.totalorder %s24, 1
    %p320 = por %p318, %p319
    %p321 = scmp.ne.s32.totalorder %s310, %s311
    %p322 = scmp.eq.s32.totalorder %s24, 0
    %p323 = por %p321, %p322
    %p324 = scmp.ne.s32.totalorder %s310, %s311
    %p325 = scmp.eq.s32.totalorder %s25, 1
    %p326 = por %p324, %p325
    %p328 = scmp.ne.s32.totalorder %s311, %s327
    %p329 = scmp.eq.s32.totalorder %s25, 0
    %p330 = por %p328, %p329
    %p331 = scmp.le.s32.totalorder 1, %s19
    %p332 = scmp.lt.s32.totalorder %s19, 3
    %p333 = pnand %p331, %p332
    %p334 = pneg %p333
    // Predicated region
    $region9: #{prism_decoder_forward.3} parent=5 // pred_check
      _
    $region10: #{prism_decoder_forward.3} parent=5 // pred_check_branch
      %336 = sbr.rel (%p333) target = $region12
    $region11: #{prism_decoder_forward.3} parent=5 // pred_region
      %s337 = ssub.s32 %s19, 1
      // Predicated region
      $region13: #{prism_decoder_forward.3} parent=11 // pred_check
        %p338 = pneg %p66
      $region14: #{prism_decoder_forward.3} parent=11 // pred_check_branch
        %340 = sbr.rel (%p338) target = $region16
      $region15: #{prism_decoder_forward.3} parent=11 // pred_region
        _
      $region16: #{prism_decoder_forward.3} parent=11 // pred_fallthru
        _
      // Predicated region
      $region17: #{prism_decoder_forward.3} parent=11 // pred_check
        %p341 = pneg %p87
      $region18: #{prism_decoder_forward.3} parent=11 // pred_check_branch
        %343 = sbr.rel (%p341) target = $region20
      $region19: #{prism_decoder_forward.3} parent=11 // pred_region
        _
      $region20: #{prism_decoder_forward.3} parent=11 // pred_fallthru
        _
      // Predicated region
      $region21: #{prism_decoder_forward.3} parent=11 // pred_check
        %p344 = pneg %p108
      $region22: #{prism_decoder_forward.3} parent=11 // pred_check_branch
        %346 = sbr.rel (%p344) target = $region24
      $region23: #{prism_decoder_forward.3} parent=11 // pred_region
        _
      $region24: #{prism_decoder_forward.3} parent=11 // pred_fallthru
        _
      // Predicated region
      $region25: #{prism_decoder_forward.3} parent=11 // pred_check
        %p347 = pneg %p129
      $region26: #{prism_decoder_forward.3} parent=11 // pred_check_branch
        %349 = sbr.rel (%p347) target = $region28
      $region27: #{prism_decoder_forward.3} parent=11 // pred_region
        _
      $region28: #{prism_decoder_forward.3} parent=11 // pred_fallthru
        _
      // Predicated region
      $region29: #{prism_decoder_forward.3} parent=11 // pred_check
        %p350 = pneg %p150
      $region30: #{prism_decoder_forward.3} parent=11 // pred_check_branch
        %352 = sbr.rel (%p350) target = $region32
      $region31: #{prism_decoder_forward.3} parent=11 // pred_region
        _
      $region32: #{prism_decoder_forward.3} parent=11 // pred_fallthru
        _
      // Predicated region
      $region33: #{prism_decoder_forward.3} parent=11 // pred_check
        %p353 = pneg %p171
      $region34: #{prism_decoder_forward.3} parent=11 // pred_check_branch
        %355 = sbr.rel (%p353) target = $region36
      $region35: #{prism_decoder_forward.3} parent=11 // pred_region
        _
      $region36: #{prism_decoder_forward.3} parent=11 // pred_fallthru
        _
      // Predicated region
      $region37: #{prism_decoder_forward.3} parent=11 // pred_check
        %p356 = pneg %p192
      $region38: #{prism_decoder_forward.3} parent=11 // pred_check_branch
        %358 = sbr.rel (%p356) target = $region40
      $region39: #{prism_decoder_forward.3} parent=11 // pred_region
        _
      $region40: #{prism_decoder_forward.3} parent=11 // pred_fallthru
        _
      // Predicated region
      $region41: #{prism_decoder_forward.3} parent=11 // pred_check
        %p359 = pneg %p213
      $region42: #{prism_decoder_forward.3} parent=11 // pred_check_branch
        %361 = sbr.rel (%p359) target = $region44
      $region43: #{prism_decoder_forward.3} parent=11 // pred_region
        _
      $region44: #{prism_decoder_forward.3} parent=11 // pred_fallthru
        _
      // Predicated region
      $region45: #{prism_decoder_forward.3} parent=11 // pred_check
        %p362 = pneg %p234
      $region46: #{prism_decoder_forward.3} parent=11 // pred_check_branch
        %364 = sbr.rel (%p362) target = $region48
      $region47: #{prism_decoder_forward.3} parent=11 // pred_region
        _
      $region48: #{prism_decoder_forward.3} parent=11 // pred_fallthru
        _
      // Predicated region
      $region49: #{prism_decoder_forward.3} parent=11 // pred_check
        %p365 = pneg %p255
      $region50: #{prism_decoder_forward.3} parent=11 // pred_check_branch
        %367 = sbr.rel (%p365) target = $region52
      $region51: #{prism_decoder_forward.3} parent=11 // pred_region
        _
      $region52: #{prism_decoder_forward.3} parent=11 // pred_fallthru
        _
      // Predicated region
      $region53: #{prism_decoder_forward.3} parent=11 // pred_check
        %p368 = pneg %p276
      $region54: #{prism_decoder_forward.3} parent=11 // pred_check_branch
        %370 = sbr.rel (%p368) target = $region56
      $region55: #{prism_decoder_forward.3} parent=11 // pred_region
        _
      $region56: #{prism_decoder_forward.3} parent=11 // pred_fallthru
        _
      // Predicated region
      $region57: #{prism_decoder_forward.3} parent=11 // pred_check
        %p371 = pneg %p297
      $region58: #{prism_decoder_forward.3} parent=11 // pred_check_branch
        %373 = sbr.rel (%p371) target = $region60
      $region59: #{prism_decoder_forward.3} parent=11 // pred_region
        _
      $region60: #{prism_decoder_forward.3} parent=11 // pred_fallthru
        _
    $region12: #{prism_decoder_forward.3} parent=5 // pred_fallthru
      _
    %p374 = scmp.lt.s32.totalorder %s19, 2
    // Predicated region
    $region61: #{prism_decoder_forward.3} parent=5 // pred_check
      %p375 = pneg %p374
    $region62: #{prism_decoder_forward.3} parent=5 // pred_check_branch
      %377 = sbr.rel (%p375) target = $region64
    $region63: #{prism_decoder_forward.3} parent=5 // pred_region
      // Predicated region
      $region65: #{prism_decoder_forward.3} parent=63 // pred_check
        %p378 = pneg %p39
      $region66: #{prism_decoder_forward.3} parent=63 // pred_check_branch
        %380 = sbr.rel (%p378) target = $region68
      $region67: #{prism_decoder_forward.3} parent=63 // pred_region
        %s381 = smul.u32 6, %s19
        %p382 = scmp.lt.s32.totalorder %s381, 11
        %s383 = scalar_select %p382, %s381, 11
        %s384 = smul.addr %s383, 4
        %s385 = scalar_lea.vmem %s0, %s384
        %s386 = smul.u32 6, %s19
      $region68: #{prism_decoder_forward.3} parent=63 // pred_fallthru
        _
    $region64: #{prism_decoder_forward.3} parent=5 // pred_fallthru
      _
    %p387 = scmp.le.s32.totalorder 1, %s19
    %p388 = scmp.lt.s32.totalorder %s19, 3
    %p389 = pnand %p387, %p388
    %p390 = pneg %p389
    // Predicated region
    $region69: #{prism_decoder_forward.3} parent=5 // pred_check
      _
    $region70: #{prism_decoder_forward.3} parent=5 // pred_check_branch
      %392 = sbr.rel (%p389) target = $region72
    $region71: #{prism_decoder_forward.3} parent=5 // pred_region
      %s393 = ssub.s32 %s19, 1
      %s394 = smul.u32 6, %s24
      %p395 = scmp.lt.s32.totalorder %s394, 11
      %s396 = scalar_select %p395, %s394, 11
      %s397 = smul.addr %s396, 4
      %s398 = scalar_lea.vmem %s0, %s397
      %p399 = pneg %p45
      %p400 = pneg %p42
      %p401 = pneg %p66
      %p402 = pneg %p63
      %p403 = pneg %p87
      %p404 = pneg %p84
      %p405 = pneg %p108
      %p406 = pneg %p105
      %p407 = pneg %p129
      %p408 = pneg %p126
      %p409 = pneg %p150
      %p410 = pneg %p147
      %p411 = pneg %p171
      %p412 = pneg %p168
      %p413 = pneg %p192
      %p414 = pneg %p189
      %p415 = pneg %p213
      %p416 = pneg %p210
      %p417 = pneg %p234
      %p418 = pneg %p231
      %p419 = pneg %p255
      %p420 = pneg %p252
      %p421 = pneg %p276
      %p422 = pneg %p273
      %p423 = pneg %p297
      %p424 = pneg %p294
      %p425 = pneg %p323
      %p426 = pneg %p320
      %s427 = smul.u32 6, %s24
      %p428 = scmp.lt.s32.totalorder %s427, 11
      %s429 = scalar_select %p428, %s427, 11
      %s430 = smul.addr %s429, 8
      %s431 = scalar_lea.vmem %s13, %s430
      %s432 = smul.u32 6, %s24
      %p433 = scmp.lt.s32.totalorder %s432, 11
      %s434 = scalar_select %p433, %s432, 11
      %s435 = smul.addr %s434, 4
      %s436 = scalar_lea.vmem %s0, %s435
      %s437 = smul.u32 6, %s24
      %s438 = smul.u32 6, %s24
      %p439 = scmp.lt.s32.totalorder %s438, 11
      %s440 = scalar_select %p439, %s438, 11
      %s441 = smul.addr %s440, 8
      %s442 = scalar_lea.vmem %s13, %s441
      %s443 = smul.u32 6, %s24
      %v445 = vld [vmem:[%s436] sm:$0xf]
      %v446 = vld [vmem:[%s436 + $0x4] sm:$0xf]
      %v447 = vld [vmem:[%s436 + $0x8] sm:$0xf]
      %v448 = vld [vmem:[%s436 + $0xc] sm:$0xf]
      %v449 = vld [vmem:[%s436 + $0x10] sm:$0xf]
      %v450 = vld [vmem:[%s436 + $0x14] sm:$0xf]
      %v451 = vld [vmem:[%s1] sm:$0xf]
      %v452 = vld [vmem:[%s1 + $0x4] sm:$0xf]
      %v453 = vld [vmem:[%s1 + $0x8] sm:$0xf]
      %v454 = vld [vmem:[%s1 + $0xc] sm:$0xf]
      %v455 = vld [vmem:[%s1 + $0x10] sm:$0xf]
      %v456 = vld [vmem:[%s1 + $0x14] sm:$0xf]
      %v457 = vld [vmem:[%s1 + $0x18] sm:$0xf]
      %v458 = vld [vmem:[%s1 + $0x1c] sm:$0xf]
      %v459 = vld [vmem:[%s1 + $0x20] sm:$0xf]
      %v460 = vld [vmem:[%s1 + $0x24] sm:$0xf]
      %v461 = vld [vmem:[%s1 + $0x28] sm:$0xf]
      %v462 = vld [vmem:[%s1 + $0x2c] sm:$0xf]
      %v463 = vld [vmem:[%s1 + $0x30] sm:$0xf]
      %v464 = vld [vmem:[%s1 + $0x34] sm:$0xf]
      %v465 = vld [vmem:[%s1 + $0x38] sm:$0xf]
      %v466 = vld [vmem:[%s1 + $0x3c] sm:$0xf]
      %v467 = vld [vmem:[%s2] sm:$0x1]
      %v469 = vlaneseq
      %v470 = vshrl.u32 %v469, 7
      %v471 = vsub.s32 0, %v470
      %v472 = vrot.slane %v467, %v471
      %v480 = vunpack.c.l.b16 %v445
      %v481 = vunpack.c.l.b16 %v446
      %v482 = vunpack.c.l.b16 %v447
      %v483 = vunpack.c.l.b16 %v448
      %v484 = vunpack.c.l.b16 %v449
      %v485 = vunpack.c.l.b16 %v450
      %v486 = vpack.c.b16 %v481, %v480
      %v487 = vpack.c.b16 %v483, %v482
      %v488 = vpack.c.b16 %v485, %v484
      %v508 = vunpack.c.l.b16 %v451
      %v509 = vunpack.c.l.b16 %v452
      %v510 = vunpack.c.l.b16 %v453
      %v511 = vunpack.c.l.b16 %v454
      %v512 = vunpack.c.l.b16 %v455
      %v513 = vunpack.c.l.b16 %v456
      %v514 = vunpack.c.l.b16 %v457
      %v515 = vunpack.c.l.b16 %v458
      %v516 = vunpack.c.l.b16 %v459
      %v517 = vunpack.c.l.b16 %v460
      %v518 = vunpack.c.l.b16 %v461
      %v519 = vunpack.c.l.b16 %v462
      %v520 = vunpack.c.l.b16 %v463
      %v521 = vunpack.c.l.b16 %v464
      %v522 = vunpack.c.l.b16 %v465
      %v523 = vunpack.c.l.b16 %v466
      %v524 = vpack.c.b16 %v509, %v508
      %v525 = vpack.c.b16 %v511, %v510
      %v526 = vpack.c.b16 %v513, %v512
      %v527 = vpack.c.b16 %v515, %v514
      %v528 = vpack.c.b16 %v517, %v516
      %v529 = vpack.c.b16 %v519, %v518
      %v530 = vpack.c.b16 %v521, %v520
      %v531 = vpack.c.b16 %v523, %v522
      %540 = vmatprep.subr.bf16.mxu0 0
      %541 = vmatpush1.bf16.msra.mxu0 %v524
      %542 = vmatprep.subr.bf16.mxu0 0
      %543 = vmatpush1.bf16.msra.mxu0 %v525
      %544 = vmatprep.subr.bf16.mxu0 0
      %545 = vmatpush1.bf16.msra.mxu0 %v526
      %546 = vmatprep.subr.bf16.mxu0 0
      %547 = vmatpush1.bf16.msra.mxu0 %v527
      %548 = vmatprep.subr.bf16.mxu0 0
      %549 = vmatpush1.bf16.msra.mxu0 %v528
      %550 = vmatprep.subr.bf16.mxu0 0
      %551 = vmatpush1.bf16.msra.mxu0 %v529
      %552 = vmatprep.subr.bf16.mxu0 0
      %553 = vmatpush1.bf16.msra.mxu0 %v530
      %554 = vmatprep.subr.bf16.mxu0 0
      %555 = vmatpush1.bf16.msra.mxu0 %v531
      %556 = vmatprep.subr.bf16.mxu0 0
      %557 = vmatpush1.bf16.msra.mxu0 0
      %558 = vmatprep.subr.bf16.mxu0 0
      %559 = vmatpush1.bf16.msra.mxu0 0
      %560 = vmatprep.subr.bf16.mxu0 0
      %561 = vmatpush1.bf16.msra.mxu0 0
      %562 = vmatprep.subr.bf16.mxu0 0
      %563 = vmatpush1.bf16.msra.mxu0 0
      %564 = vmatprep.subr.bf16.mxu0 0
      %565 = vmatpush1.bf16.msra.mxu0 0
      %566 = vmatprep.subr.bf16.mxu0 0
      %567 = vmatpush1.bf16.msra.mxu0 0
      %568 = vmatprep.subr.bf16.mxu0 0
      %569 = vmatpush1.bf16.msra.mxu0 0
      %570 = vmatprep.subr.bf16.mxu0 0
      %571 = vmatpush1.bf16.msra.mxu0 0
      %572 = vmatprep.mubr.bf16.mxu0 0
      %573 = vmatmul.mubr.bf16.gmra.mrb[0].mxu0 %v486
      %v574 = vpop.f32.mrb[0].mxu0
      %v575 = vadd.f32 %v472, %v574
      %v576 = vpop.f32.mrb[0].mxu0
      %v577 = vpop.f32.mrb[0].mxu0
      %v578 = vadd.f32 %v472, %v577
      %v579 = vpop.f32.mrb[0].mxu0
      %580 = vmatprep.mubr.bf16.mxu0 0
      %581 = vmatmul.mubr.bf16.gmra.mrb[0].mxu0 %v487
      %v582 = vpop.f32.mrb[0].mxu0
      %v583 = vadd.f32 %v472, %v582
      %v584 = vpop.f32.mrb[0].mxu0
      %v585 = vpop.f32.mrb[0].mxu0
      %v586 = vadd.f32 %v472, %v585
      %v587 = vpop.f32.mrb[0].mxu0
      %588 = vmatprep.mubr.bf16.mxu0 0
      %589 = vmatmul.mubr.bf16.gmra.mrb[0].mxu0 %v488
      %v590 = vpop.f32.mrb[0].mxu0
      %v591 = vadd.f32 %v472, %v590
      %v592 = vpop.f32.mrb[0].mxu0
      %v593 = vpop.f32.mrb[0].mxu0
      %v594 = vadd.f32 %v472, %v593
      %v595 = vpop.f32.mrb[0].mxu0
      %596 = vdwg.mxu0
      %v597 = vmax.f32 %v575, 0.0
      %v598 = vmax.f32 %v578, 0.0
      %v599 = vmax.f32 %v583, 0.0
      %v600 = vmax.f32 %v586, 0.0
      %v601 = vmax.f32 %v591, 0.0
      %v602 = vmax.f32 %v594, 0.0
      %v603 = vpack.c.bf16 %v598, %v597
      %v604 = vpack.c.bf16 %v600, %v599
      %v605 = vpack.c.bf16 %v602, %v601
      %v606 = vld [vmem:[%s3] sm:$0xff]
      %v607 = vld [vmem:[%s3 + $0x8] sm:$0xff]
      %v608 = vld [vmem:[%s3 + $0x10] sm:$0xff]
      %v609 = vld [vmem:[%s3 + $0x18] sm:$0xff]
      %v610 = vld [vmem:[%s3 + $0x20] sm:$0xff]
      %v611 = vld [vmem:[%s3 + $0x28] sm:$0xff]
      %v612 = vld [vmem:[%s3 + $0x30] sm:$0xff]
      %v613 = vld [vmem:[%s3 + $0x38] sm:$0xff]
      %v614 = vld [vmem:[%s3 + $0x40] sm:$0xff]
      %v615 = vld [vmem:[%s3 + $0x48] sm:$0xff]
      %v616 = vld [vmem:[%s3 + $0x50] sm:$0xff]
      %v617 = vld [vmem:[%s3 + $0x58] sm:$0xff]
      %v618 = vld [vmem:[%s3 + $0x60] sm:$0xff]
      %v619 = vld [vmem:[%s3 + $0x68] sm:$0xff]
      %v620 = vld [vmem:[%s3 + $0x70] sm:$0xff]
      %v621 = vld [vmem:[%s3 + $0x78] sm:$0xff]
      %v622 = vld [vmem:[%s3 + $0x80] sm:$0xff]
      %v623 = vld [vmem:[%s3 + $0x88] sm:$0xff]
      %v624 = vld [vmem:[%s3 + $0x90] sm:$0xff]
      %v625 = vld [vmem:[%s3 + $0x98] sm:$0xff]
      %v626 = vld [vmem:[%s3 + $0xa0] sm:$0xff]
      %v627 = vld [vmem:[%s3 + $0xa8] sm:$0xff]
      %v628 = vld [vmem:[%s3 + $0xb0] sm:$0xff]
      %v629 = vld [vmem:[%s3 + $0xb8] sm:$0xff]
      %v630 = vld [vmem:[%s3 + $0xc0] sm:$0xff]
      %v631 = vld [vmem:[%s3 + $0xc8] sm:$0xff]
      %v632 = vld [vmem:[%s3 + $0xd0] sm:$0xff]
      %v633 = vld [vmem:[%s3 + $0xd8] sm:$0xff]
      %v634 = vld [vmem:[%s3 + $0xe0] sm:$0xff]
      %v635 = vld [vmem:[%s3 + $0xe8] sm:$0xff]
      %v636 = vld [vmem:[%s3 + $0xf0] sm:$0xff]
      %v637 = vld [vmem:[%s3 + $0xf8] sm:$0xff]
      %v638 = vld [vmem:[%s4] sm:$0xf]
      %v640 = vlaneseq
      %v641 = vshrl.u32 %v640, 7
      %v642 = vsub.s32 0, %v641
      %v643 = vrot.slane %v638, %v642
      %v644 = vlaneseq
      %v645 = vshrl.u32 %v644, 7
      %v646 = vsub.s32 1, %v645
      %v647 = vrot.slane %v638, %v646
      %v648 = vlaneseq
      %v649 = vshrl.u32 %v648, 7
      %v650 = vsub.s32 2, %v649
      %v651 = vrot.slane %v638, %v650
      %v652 = vlaneseq
      %v653 = vshrl.u32 %v652, 7
      %v654 = vsub.s32 3, %v653
      %v655 = vrot.slane %v638, %v654
      %v692 = vunpack.c.l.b16 %v606
      %v693 = vunpack.c.h.b16 %v606
      %v694 = vunpack.c.l.b16 %v607
      %v695 = vunpack.c.h.b16 %v607
      %v696 = vunpack.c.l.b16 %v608
      %v697 = vunpack.c.h.b16 %v608
      %v698 = vunpack.c.l.b16 %v609
      %v699 = vunpack.c.h.b16 %v609
      %v700 = vunpack.c.l.b16 %v610
      %v701 = vunpack.c.h.b16 %v610
      %v702 = vunpack.c.l.b16 %v611
      %v703 = vunpack.c.h.b16 %v611
      %v704 = vunpack.c.l.b16 %v612
      %v705 = vunpack.c.h.b16 %v612
      %v706 = vunpack.c.l.b16 %v613
      %v707 = vunpack.c.h.b16 %v613
      %v708 = vunpack.c.l.b16 %v614
      %v709 = vunpack.c.h.b16 %v614
      %v710 = vunpack.c.l.b16 %v615
      %v711 = vunpack.c.h.b16 %v615
      %v712 = vunpack.c.l.b16 %v616
      %v713 = vunpack.c.h.b16 %v616
      %v714 = vunpack.c.l.b16 %v617
      %v715 = vunpack.c.h.b16 %v617
      %v716 = vunpack.c.l.b16 %v618
      %v717 = vunpack.c.h.b16 %v618
      %v718 = vunpack.c.l.b16 %v619
      %v719 = vunpack.c.h.b16 %v619
      %v720 = vunpack.c.l.b16 %v620
      %v721 = vunpack.c.h.b16 %v620
      %v722 = vunpack.c.l.b16 %v621
      %v723 = vunpack.c.h.b16 %v621
      %v724 = vunpack.c.l.b16 %v622
      %v725 = vunpack.c.h.b16 %v622
      %v726 = vunpack.c.l.b16 %v623
      %v727 = vunpack.c.h.b16 %v623
      %v728 = vunpack.c.l.b16 %v624
      %v729 = vunpack.c.h.b16 %v624
      %v730 = vunpack.c.l.b16 %v625
      %v731 = vunpack.c.h.b16 %v625
      %v732 = vunpack.c.l.b16 %v626
      %v733 = vunpack.c.h.b16 %v626
      %v734 = vunpack.c.l.b16 %v627
      %v735 = vunpack.c.h.b16 %v627
      %v736 = vunpack.c.l.b16 %v628
      %v737 = vunpack.c.h.b16 %v628
      %v738 = vunpack.c.l.b16 %v629
      %v739 = vunpack.c.h.b16 %v629
      %v740 = vunpack.c.l.b16 %v630
      %v741 = vunpack.c.h.b16 %v630
      %v742 = vunpack.c.l.b16 %v631
      %v743 = vunpack.c.h.b16 %v631
      %v744 = vunpack.c.l.b16 %v632
      %v745 = vunpack.c.h.b16 %v632
      %v746 = vunpack.c.l.b16 %v633
      %v747 = vunpack.c.h.b16 %v633
      %v748 = vunpack.c.l.b16 %v634
      %v749 = vunpack.c.h.b16 %v634
      %v750 = vunpack.c.l.b16 %v635
      %v751 = vunpack.c.h.b16 %v635
      %v752 = vunpack.c.l.b16 %v636
      %v753 = vunpack.c.h.b16 %v636
      %v754 = vunpack.c.l.b16 %v637
      %v755 = vunpack.c.h.b16 %v637
      %v756 = vpack.c.b16 %v696, %v692
      %v757 = vpack.c.b16 %v697, %v693
      %v758 = vpack.c.b16 %v698, %v694
      %v759 = vpack.c.b16 %v699, %v695
      %v760 = vpack.c.b16 %v704, %v700
      %v761 = vpack.c.b16 %v705, %v701
      %v762 = vpack.c.b16 %v706, %v702
      %v763 = vpack.c.b16 %v707, %v703
      %v764 = vpack.c.b16 %v712, %v708
      %v765 = vpack.c.b16 %v713, %v709
      %v766 = vpack.c.b16 %v714, %v710
      %v767 = vpack.c.b16 %v715, %v711
      %v768 = vpack.c.b16 %v720, %v716
      %v769 = vpack.c.b16 %v721, %v717
      %v770 = vpack.c.b16 %v722, %v718
      %v771 = vpack.c.b16 %v723, %v719
      %v772 = vpack.c.b16 %v728, %v724
      %v773 = vpack.c.b16 %v729, %v725
      %v774 = vpack.c.b16 %v730, %v726
      %v775 = vpack.c.b16 %v731, %v727
      %v776 = vpack.c.b16 %v736, %v732
      %v777 = vpack.c.b16 %v737, %v733
      %v778 = vpack.c.b16 %v738, %v734
      %v779 = vpack.c.b16 %v739, %v735
      %v780 = vpack.c.b16 %v744, %v740
      %v781 = vpack.c.b16 %v745, %v741
      %v782 = vpack.c.b16 %v746, %v742
      %v783 = vpack.c.b16 %v747, %v743
      %v784 = vpack.c.b16 %v752, %v748
      %v785 = vpack.c.b16 %v753, %v749
      %v786 = vpack.c.b16 %v754, %v750
      %v787 = vpack.c.b16 %v755, %v751
      %820 = vmatprep.subr.bf16.mxu0 %v757
      %821 = vmatpush1.bf16.msra.mxu0 %v756
      %822 = vmatprep.subr.bf16.mxu0 %v761
      %823 = vmatpush1.bf16.msra.mxu0 %v760
      %824 = vmatprep.subr.bf16.mxu0 %v765
      %825 = vmatpush1.bf16.msra.mxu0 %v764
      %826 = vmatprep.subr.bf16.mxu0 %v769
      %827 = vmatpush1.bf16.msra.mxu0 %v768
      %828 = vmatprep.subr.bf16.mxu0 %v773
      %829 = vmatpush1.bf16.msra.mxu0 %v772
      %830 = vmatprep.subr.bf16.mxu0 %v777
      %831 = vmatpush1.bf16.msra.mxu0 %v776
      %832 = vmatprep.subr.bf16.mxu0 %v781
      %833 = vmatpush1.bf16.msra.mxu0 %v780
      %834 = vmatprep.subr.bf16.mxu0 %v785
      %835 = vmatpush1.bf16.msra.mxu0 %v784
      %836 = vmatprep.subr.bf16.mxu0 0
      %837 = vmatpush1.bf16.msra.mxu0 0
      %838 = vmatprep.subr.bf16.mxu0 0
      %839 = vmatpush1.bf16.msra.mxu0 0
      %840 = vmatprep.subr.bf16.mxu0 0
      %841 = vmatpush1.bf16.msra.mxu0 0
      %842 = vmatprep.subr.bf16.mxu0 0
      %843 = vmatpush1.bf16.msra.mxu0 0
      %844 = vmatprep.subr.bf16.mxu0 0
      %845 = vmatpush1.bf16.msra.mxu0 0
      %846 = vmatprep.subr.bf16.mxu0 0
      %847 = vmatpush1.bf16.msra.mxu0 0
      %848 = vmatprep.subr.bf16.mxu0 0
      %849 = vmatpush1.bf16.msra.mxu0 0
      %850 = vmatprep.subr.bf16.mxu0 0
      %851 = vmatpush1.bf16.msra.mxu0 0
      %852 = vmatprep.mubr.bf16.mxu0 0
      %853 = vmatmul.mubr.bf16.gmra.mrb[0].mxu0 %v603
      %v854 = vpop.f32.mrb[0].mxu0
      %v855 = vadd.f32 %v643, %v854
      %v856 = vpop.f32.mrb[0].mxu0
      %v857 = vadd.f32 %v647, %v856
      %v858 = vpop.f32.mrb[0].mxu0
      %v859 = vadd.f32 %v643, %v858
      %v860 = vpop.f32.mrb[0].mxu0
      %v861 = vadd.f32 %v647, %v860
      %862 = vmatprep.mubr.bf16.mxu0 0
      %863 = vmatmul.mubr.bf16.gmra.mrb[0].mxu0 %v604
      %v864 = vpop.f32.mrb[0].mxu0
      %v865 = vadd.f32 %v643, %v864
      %v866 = vpop.f32.mrb[0].mxu0
      %v867 = vadd.f32 %v647, %v866
      %v868 = vpop.f32.mrb[0].mxu0
      %v869 = vadd.f32 %v643, %v868
      %v870 = vpop.f32.mrb[0].mxu0
      %v871 = vadd.f32 %v647, %v870
      %872 = vmatprep.mubr.bf16.mxu0 0
      %873 = vmatmul.mubr.bf16.gmra.mrb[0].mxu0 %v605
      %v874 = vpop.f32.mrb[0].mxu0
      %v875 = vadd.f32 %v643, %v874
      %v876 = vpop.f32.mrb[0].mxu0
      %v877 = vadd.f32 %v647, %v876
      %v878 = vpop.f32.mrb[0].mxu0
      %v879 = vadd.f32 %v643, %v878
      %v880 = vpop.f32.mrb[0].mxu0
      %v881 = vadd.f32 %v647, %v880
      %882 = vdwg.mxu0
      %883 = vmatprep.subr.bf16.mxu0 %v759
      %884 = vmatpush1.bf16.msra.mxu0 %v758
      %885 = vmatprep.subr.bf16.mxu0 %v763
      %886 = vmatpush1.bf16.msra.mxu0 %v762
      %887 = vmatprep.subr.bf16.mxu0 %v767
      %888 = vmatpush1.bf16.msra.mxu0 %v766
      %889 = vmatprep.subr.bf16.mxu0 %v771
      %890 = vmatpush1.bf16.msra.mxu0 %v770
      %891 = vmatprep.subr.bf16.mxu0 %v775
      %892 = vmatpush1.bf16.msra.mxu0 %v774
      %893 = vmatprep.subr.bf16.mxu0 %v779
      %894 = vmatpush1.bf16.msra.mxu0 %v778
      %895 = vmatprep.subr.bf16.mxu0 %v783
      %896 = vmatpush1.bf16.msra.mxu0 %v782
      %897 = vmatprep.subr.bf16.mxu0 %v787
      %898 = vmatpush1.bf16.msra.mxu0 %v786
      %899 = vmatprep.subr.bf16.mxu0 0
      %900 = vmatpush1.bf16.msra.mxu0 0
      %901 = vmatprep.subr.bf16.mxu0 0
      %902 = vmatpush1.bf16.msra.mxu0 0
      %903 = vmatprep.subr.bf16.mxu0 0
      %904 = vmatpush1.bf16.msra.mxu0 0
      %905 = vmatprep.subr.bf16.mxu0 0
      %906 = vmatpush1.bf16.msra.mxu0 0
      %907 = vmatprep.subr.bf16.mxu0 0
      %908 = vmatpush1.bf16.msra.mxu0 0
      %909 = vmatprep.subr.bf16.mxu0 0
      %910 = vmatpush1.bf16.msra.mxu0 0
      %911 = vmatprep.subr.bf16.mxu0 0
      %912 = vmatpush1.bf16.msra.mxu0 0
      %913 = vmatprep.subr.bf16.mxu0 0
      %914 = vmatpush1.bf16.msra.mxu0 0
      %915 = vmatprep.mubr.bf16.mxu0 0
      %916 = vmatmul.mubr.bf16.gmra.mrb[0].mxu0 %v603
      %v917 = vpop.f32.mrb[0].mxu0
      %v918 = vadd.f32 %v651, %v917
      %v919 = vpop.f32.mrb[0].mxu0
      %v920 = vadd.f32 %v655, %v919
      %v921 = vpop.f32.mrb[0].mxu0
      %v922 = vadd.f32 %v651, %v921
      %v923 = vpop.f32.mrb[0].mxu0
      %v924 = vadd.f32 %v655, %v923
      %925 = vmatprep.mubr.bf16.mxu0 0
      %926 = vmatmul.mubr.bf16.gmra.mrb[0].mxu0 %v604
      %v927 = vpop.f32.mrb[0].mxu0
      %v928 = vadd.f32 %v651, %v927
      %v929 = vpop.f32.mrb[0].mxu0
      %v930 = vadd.f32 %v655, %v929
      %v931 = vpop.f32.mrb[0].mxu0
      %v932 = vadd.f32 %v651, %v931
      %v933 = vpop.f32.mrb[0].mxu0
      %v934 = vadd.f32 %v655, %v933
      %935 = vmatprep.mubr.bf16.mxu0 0
      %936 = vmatmul.mubr.bf16.gmra.mrb[0].mxu0 %v605
      %v937 = vpop.f32.mrb[0].mxu0
      %v938 = vadd.f32 %v651, %v937
      %v939 = vpop.f32.mrb[0].mxu0
      %v940 = vadd.f32 %v655, %v939
      %v941 = vpop.f32.mrb[0].mxu0
      %v942 = vadd.f32 %v651, %v941
      %v943 = vpop.f32.mrb[0].mxu0
      %v944 = vadd.f32 %v655, %v943
      %945 = vdwg.mxu0
      %v946 = vmax.f32 %v855, 0.0
      %v947 = vmax.f32 %v857, 0.0
      %v948 = vmax.f32 %v918, 0.0
      %v949 = vmax.f32 %v920, 0.0
      %v950 = vmax.f32 %v859, 0.0
      %v951 = vmax.f32 %v861, 0.0
      %v952 = vmax.f32 %v922, 0.0
      %v953 = vmax.f32 %v924, 0.0
      %v954 = vmax.f32 %v865, 0.0
      %v955 = vmax.f32 %v867, 0.0
      %v956 = vmax.f32 %v928, 0.0
      %v957 = vmax.f32 %v930, 0.0
      %v958 = vmax.f32 %v869, 0.0
      %v959 = vmax.f32 %v871, 0.0
      %v960 = vmax.f32 %v932, 0.0
      %v961 = vmax.f32 %v934, 0.0
      %v962 = vmax.f32 %v875, 0.0
      %v963 = vmax.f32 %v877, 0.0
      %v964 = vmax.f32 %v938, 0.0
      %v965 = vmax.f32 %v940, 0.0
      %v966 = vmax.f32 %v879, 0.0
      %v967 = vmax.f32 %v881, 0.0
      %v968 = vmax.f32 %v942, 0.0
      %v969 = vmax.f32 %v944, 0.0
      %v970 = vpack.c.bf16 %v950, %v946
      %v971 = vpack.c.bf16 %v951, %v947
      %v972 = vpack.c.bf16 %v952, %v948
      %v973 = vpack.c.bf16 %v953, %v949
      %v974 = vpack.c.bf16 %v958, %v954
      %v975 = vpack.c.bf16 %v959, %v955
      %v976 = vpack.c.bf16 %v960, %v956
      %v977 = vpack.c.bf16 %v961, %v957
      %v978 = vpack.c.bf16 %v966, %v962
      %v979 = vpack.c.bf16 %v967, %v963
      %v980 = vpack.c.bf16 %v968, %v964
      %v981 = vpack.c.bf16 %v969, %v965
      %v982 = vld [vmem:[%s5] sm:$0xff]
      %v983 = vld [vmem:[%s5 + $0x8] sm:$0xff]
      %v984 = vld [vmem:[%s5 + $0x10] sm:$0xff]
      %v985 = vld [vmem:[%s5 + $0x18] sm:$0xff]
      %v986 = vld [vmem:[%s5 + $0x20] sm:$0xff]
      %v987 = vld [vmem:[%s5 + $0x28] sm:$0xff]
      %v988 = vld [vmem:[%s5 + $0x30] sm:$0xff]
      %v989 = vld [vmem:[%s5 + $0x38] sm:$0xff]
      %v990 = vld [vmem:[%s5 + $0x40] sm:$0xff]
      %v991 = vld [vmem:[%s5 + $0x48] sm:$0xff]
      %v992 = vld [vmem:[%s5 + $0x50] sm:$0xff]
      %v993 = vld [vmem:[%s5 + $0x58] sm:$0xff]
      %v994 = vld [vmem:[%s5 + $0x60] sm:$0xff]
      %v995 = vld [vmem:[%s5 + $0x68] sm:$0xff]
      %v996 = vld [vmem:[%s5 + $0x70] sm:$0xff]
      %v997 = vld [vmem:[%s5 + $0x78] sm:$0xff]
      %v998 = vld [vmem:[%s5 + $0x80] sm:$0xff]
      %v999 = vld [vmem:[%s5 + $0x88] sm:$0xff]
      %v1000 = vld [vmem:[%s5 + $0x90] sm:$0xff]
      %v1001 = vld [vmem:[%s5 + $0x98] sm:$0xff]
      %v1002 = vld [vmem:[%s5 + $0xa0] sm:$0xff]
      %v1003 = vld [vmem:[%s5 + $0xa8] sm:$0xff]
      %v1004 = vld [vmem:[%s5 + $0xb0] sm:$0xff]
      %v1005 = vld [vmem:[%s5 + $0xb8] sm:$0xff]
      %v1006 = vld [vmem:[%s5 + $0xc0] sm:$0xff]
      %v1007 = vld [vmem:[%s5 + $0xc8] sm:$0xff]
      %v1008 = vld [vmem:[%s5 + $0xd0] sm:$0xff]
      %v1009 = vld [vmem:[%s5 + $0xd8] sm:$0xff]
      %v1010 = vld [vmem:[%s5 + $0xe0] sm:$0xff]
      %v1011 = vld [vmem:[%s5 + $0xe8] sm:$0xff]
      %v1012 = vld [vmem:[%s5 + $0xf0] sm:$0xff]
      %v1013 = vld [vmem:[%s5 + $0xf8] sm:$0xff]
      %v1014 = vld [vmem:[%s5 + $0x100] sm:$0xff]
      %v1015 = vld [vmem:[%s5 + $0x108] sm:$0xff]
      %v1016 = vld [vmem:[%s5 + $0x110] sm:$0xff]
      %v1017 = vld [vmem:[%s5 + $0x118] sm:$0xff]
      %v1018 = vld [vmem:[%s5 + $0x120] sm:$0xff]
      %v1019 = vld [vmem:[%s5 + $0x128] sm:$0xff]
      %v1020 = vld [vmem:[%s5 + $0x130] sm:$0xff]
      %v1021 = vld [vmem:[%s5 + $0x138] sm:$0xff]
      %v1022 = vld [vmem:[%s5 + $0x140] sm:$0xff]
      %v1023 = vld [vmem:[%s5 + $0x148] sm:$0xff]
      %v1024 = vld [vmem:[%s5 + $0x150] sm:$0xff]
      %v1025 = vld [vmem:[%s5 + $0x158] sm:$0xff]
      %v1026 = vld [vmem:[%s5 + $0x160] sm:$0xff]
      %v1027 = vld [vmem:[%s5 + $0x168] sm:$0xff]
      %v1028 = vld [vmem:[%s5 + $0x170] sm:$0xff]
      %v1029 = vld [vmem:[%s5 + $0x178] sm:$0xff]
      %v1030 = vld [vmem:[%s5 + $0x180] sm:$0xff]
      %v1031 = vld [vmem:[%s5 + $0x188] sm:$0xff]
      %v1032 = vld [vmem:[%s5 + $0x190] sm:$0xff]
      %v1033 = vld [vmem:[%s5 + $0x198] sm:$0xff]
      %v1034 = vld [vmem:[%s5 + $0x1a0] sm:$0xff]
      %v1035 = vld [vmem:[%s5 + $0x1a8] sm:$0xff]
      %v1036 = vld [vmem:[%s5 + $0x1b0] sm:$0xff]
      %v1037 = vld [vmem:[%s5 + $0x1b8] sm:$0xff]
      %v1038 = vld [vmem:[%s5 + $0x1c0] sm:$0xff]
      %v1039 = vld [vmem:[%s5 + $0x1c8] sm:$0xff]
      %v1040 = vld [vmem:[%s5 + $0x1d0] sm:$0xff]
      %v1041 = vld [vmem:[%s5 + $0x1d8] sm:$0xff]
      %v1042 = vld [vmem:[%s5 + $0x1e0] sm:$0xff]
      %v1043 = vld [vmem:[%s5 + $0x1e8] sm:$0xff]
      %v1044 = vld [vmem:[%s5 + $0x1f0] sm:$0xff]
      %v1045 = vld [vmem:[%s5 + $0x1f8] sm:$0xff]
      %v1046 = vld [vmem:[%s6] sm:$0x3]
      %v1048 = vlaneseq
      %v1049 = vshrl.u32 %v1048, 7
      %v1050 = vsub.s32 0, %v1049
      %v1051 = vrot.slane %v1046, %v1050
      %v1052 = vlaneseq
      %v1053 = vshrl.u32 %v1052, 7
      %v1054 = vsub.s32 1, %v1053
      %v1055 = vrot.slane %v1046, %v1054
      %v1122 = vunpack.c.l.b16 %v982
      %v1123 = vunpack.c.h.b16 %v982
      %v1124 = vunpack.c.l.b16 %v983
      %v1125 = vunpack.c.h.b16 %v983
      %v1126 = vunpack.c.l.b16 %v984
      %v1127 = vunpack.c.h.b16 %v984
      %v1128 = vunpack.c.l.b16 %v985
      %v1129 = vunpack.c.h.b16 %v985
      %v1130 = vunpack.c.l.b16 %v986
      %v1131 = vunpack.c.h.b16 %v986
      %v1132 = vunpack.c.l.b16 %v987
      %v1133 = vunpack.c.h.b16 %v987
      %v1134 = vunpack.c.l.b16 %v988
      %v1135 = vunpack.c.h.b16 %v988
      %v1136 = vunpack.c.l.b16 %v989
      %v1137 = vunpack.c.h.b16 %v989
      %v1138 = vunpack.c.l.b16 %v990
      %v1139 = vunpack.c.h.b16 %v990
      %v1140 = vunpack.c.l.b16 %v991
      %v1141 = vunpack.c.h.b16 %v991
      %v1142 = vunpack.c.l.b16 %v992
      %v1143 = vunpack.c.h.b16 %v992
      %v1144 = vunpack.c.l.b16 %v993
      %v1145 = vunpack.c.h.b16 %v993
      %v1146 = vunpack.c.l.b16 %v994
      %v1147 = vunpack.c.h.b16 %v994
      %v1148 = vunpack.c.l.b16 %v995
      %v1149 = vunpack.c.h.b16 %v995
      %v1150 = vunpack.c.l.b16 %v996
      %v1151 = vunpack.c.h.b16 %v996
      %v1152 = vunpack.c.l.b16 %v997
      %v1153 = vunpack.c.h.b16 %v997
      %v1154 = vunpack.c.l.b16 %v998
      %v1155 = vunpack.c.h.b16 %v998
      %v1156 = vunpack.c.l.b16 %v999
      %v1157 = vunpack.c.h.b16 %v999
      %v1158 = vunpack.c.l.b16 %v1000
      %v1159 = vunpack.c.h.b16 %v1000
      %v1160 = vunpack.c.l.b16 %v1001
      %v1161 = vunpack.c.h.b16 %v1001
      %v1162 = vunpack.c.l.b16 %v1002
      %v1163 = vunpack.c.h.b16 %v1002
      %v1164 = vunpack.c.l.b16 %v1003
      %v1165 = vunpack.c.h.b16 %v1003
      %v1166 = vunpack.c.l.b16 %v1004
      %v1167 = vunpack.c.h.b16 %v1004
      %v1168 = vunpack.c.l.b16 %v1005
      %v1169 = vunpack.c.h.b16 %v1005
      %v1170 = vunpack.c.l.b16 %v1006
      %v1171 = vunpack.c.h.b16 %v1006
      %v1172 = vunpack.c.l.b16 %v1007
      %v1173 = vunpack.c.h.b16 %v1007
      %v1174 = vunpack.c.l.b16 %v1008
      %v1175 = vunpack.c.h.b16 %v1008
      %v1176 = vunpack.c.l.b16 %v1009
      %v1177 = vunpack.c.h.b16 %v1009
      %v1178 = vunpack.c.l.b16 %v1010
      %v1179 = vunpack.c.h.b16 %v1010
      %v1180 = vunpack.c.l.b16 %v1011
      %v1181 = vunpack.c.h.b16 %v1011
      %v1182 = vunpack.c.l.b16 %v1012
      %v1183 = vunpack.c.h.b16 %v1012
      %v1184 = vunpack.c.l.b16 %v1013
      %v1185 = vunpack.c.h.b16 %v1013
      %v1186 = vunpack.c.l.b16 %v1014
      %v1187 = vunpack.c.h.b16 %v1014
      %v1188 = vunpack.c.l.b16 %v1015
      %v1189 = vunpack.c.h.b16 %v1015
      %v1190 = vunpack.c.l.b16 %v1016
      %v1191 = vunpack.c.h.b16 %v1016
      %v1192 = vunpack.c.l.b16 %v1017
      %v1193 = vunpack.c.h.b16 %v1017
      %v1194 = vunpack.c.l.b16 %v1018
      %v1195 = vunpack.c.h.b16 %v1018
      %v1196 = vunpack.c.l.b16 %v1019
      %v1197 = vunpack.c.h.b16 %v1019
      %v1198 = vunpack.c.l.b16 %v1020
      %v1199 = vunpack.c.h.b16 %v1020
      %v1200 = vunpack.c.l.b16 %v1021
      %v1201 = vunpack.c.h.b16 %v1021
      %v1202 = vunpack.c.l.b16 %v1022
      %v1203 = vunpack.c.h.b16 %v1022
      %v1204 = vunpack.c.l.b16 %v1023
      %v1205 = vunpack.c.h.b16 %v1023
      %v1206 = vunpack.c.l.b16 %v1024
      %v1207 = vunpack.c.h.b16 %v1024
      %v1208 = vunpack.c.l.b16 %v1025
      %v1209 = vunpack.c.h.b16 %v1025
      %v1210 = vunpack.c.l.b16 %v1026
      %v1211 = vunpack.c.h.b16 %v1026
      %v1212 = vunpack.c.l.b16 %v1027
      %v1213 = vunpack.c.h.b16 %v1027
      %v1214 = vunpack.c.l.b16 %v1028
      %v1215 = vunpack.c.h.b16 %v1028
      %v1216 = vunpack.c.l.b16 %v1029
      %v1217 = vunpack.c.h.b16 %v1029
      %v1218 = vunpack.c.l.b16 %v1030
      %v1219 = vunpack.c.h.b16 %v1030
      %v1220 = vunpack.c.l.b16 %v1031
      %v1221 = vunpack.c.h.b16 %v1031
      %v1222 = vunpack.c.l.b16 %v1032
      %v1223 = vunpack.c.h.b16 %v1032
      %v1224 = vunpack.c.l.b16 %v1033
      %v1225 = vunpack.c.h.b16 %v1033
      %v1226 = vunpack.c.l.b16 %v1034
      %v1227 = vunpack.c.h.b16 %v1034
      %v1228 = vunpack.c.l.b16 %v1035
      %v1229 = vunpack.c.h.b16 %v1035
      %v1230 = vunpack.c.l.b16 %v1036
      %v1231 = vunpack.c.h.b16 %v1036
      %v1232 = vunpack.c.l.b16 %v1037
      %v1233 = vunpack.c.h.b16 %v1037
      %v1234 = vunpack.c.l.b16 %v1038
      %v1235 = vunpack.c.h.b16 %v1038
      %v1236 = vunpack.c.l.b16 %v1039
      %v1237 = vunpack.c.h.b16 %v1039
      %v1238 = vunpack.c.l.b16 %v1040
      %v1239 = vunpack.c.h.b16 %v1040
      %v1240 = vunpack.c.l.b16 %v1041
      %v1241 = vunpack.c.h.b16 %v1041
      %v1242 = vunpack.c.l.b16 %v1042
      %v1243 = vunpack.c.h.b16 %v1042
      %v1244 = vunpack.c.l.b16 %v1043
      %v1245 = vunpack.c.h.b16 %v1043
      %v1246 = vunpack.c.l.b16 %v1044
      %v1247 = vunpack.c.h.b16 %v1044
      %v1248 = vunpack.c.l.b16 %v1045
      %v1249 = vunpack.c.h.b16 %v1045
      %v1250 = vpack.c.b16 %v1124, %v1122
      %v1251 = vpack.c.b16 %v1125, %v1123
      %v1252 = vpack.c.b16 %v1128, %v1126
      %v1253 = vpack.c.b16 %v1129, %v1127
      %v1254 = vpack.c.b16 %v1132, %v1130
      %v1255 = vpack.c.b16 %v1133, %v1131
      %v1256 = vpack.c.b16 %v1136, %v1134
      %v1257 = vpack.c.b16 %v1137, %v1135
      %v1258 = vpack.c.b16 %v1140, %v1138
      %v1259 = vpack.c.b16 %v1141, %v1139
      %v1260 = vpack.c.b16 %v1144, %v1142
      %v1261 = vpack.c.b16 %v1145, %v1143
      %v1262 = vpack.c.b16 %v1148, %v1146
      %v1263 = vpack.c.b16 %v1149, %v1147
      %v1264 = vpack.c.b16 %v1152, %v1150
      %v1265 = vpack.c.b16 %v1153, %v1151
      %v1266 = vpack.c.b16 %v1156, %v1154
      %v1267 = vpack.c.b16 %v1157, %v1155
      %v1268 = vpack.c.b16 %v1160, %v1158
      %v1269 = vpack.c.b16 %v1161, %v1159
      %v1270 = vpack.c.b16 %v1164, %v1162
      %v1271 = vpack.c.b16 %v1165, %v1163
      %v1272 = vpack.c.b16 %v1168, %v1166
      %v1273 = vpack.c.b16 %v1169, %v1167
      %v1274 = vpack.c.b16 %v1172, %v1170
      %v1275 = vpack.c.b16 %v1173, %v1171
      %v1276 = vpack.c.b16 %v1176, %v1174
      %v1277 = vpack.c.b16 %v1177, %v1175
      %v1278 = vpack.c.b16 %v1180, %v1178
      %v1279 = vpack.c.b16 %v1181, %v1179
      %v1280 = vpack.c.b16 %v1184, %v1182
      %v1281 = vpack.c.b16 %v1185, %v1183
      %v1282 = vpack.c.b16 %v1188, %v1186
      %v1283 = vpack.c.b16 %v1189, %v1187
      %v1284 = vpack.c.b16 %v1192, %v1190
      %v1285 = vpack.c.b16 %v1193, %v1191
      %v1286 = vpack.c.b16 %v1196, %v1194
      %v1287 = vpack.c.b16 %v1197, %v1195
      %v1288 = vpack.c.b16 %v1200, %v1198
      %v1289 = vpack.c.b16 %v1201, %v1199
      %v1290 = vpack.c.b16 %v1204, %v1202
      %v1291 = vpack.c.b16 %v1205, %v1203
      %v1292 = vpack.c.b16 %v1208, %v1206
      %v1293 = vpack.c.b16 %v1209, %v1207
      %v1294 = vpack.c.b16 %v1212, %v1210
      %v1295 = vpack.c.b16 %v1213, %v1211
      %v1296 = vpack.c.b16 %v1216, %v1214
      %v1297 = vpack.c.b16 %v1217, %v1215
      %v1298 = vpack.c.b16 %v1220, %v1218
      %v1299 = vpack.c.b16 %v1221, %v1219
      %v1300 = vpack.c.b16 %v1224, %v1222
      %v1301 = vpack.c.b16 %v1225, %v1223
      %v1302 = vpack.c.b16 %v1228, %v1226
      %v1303 = vpack.c.b16 %v1229, %v1227
      %v1304 = vpack.c.b16 %v1232, %v1230
      %v1305 = vpack.c.b16 %v1233, %v1231
      %v1306 = vpack.c.b16 %v1236, %v1234
      %v1307 = vpack.c.b16 %v1237, %v1235
      %v1308 = vpack.c.b16 %v1240, %v1238
      %v1309 = vpack.c.b16 %v1241, %v1239
      %v1310 = vpack.c.b16 %v1244, %v1242
      %v1311 = vpack.c.b16 %v1245, %v1243
      %v1312 = vpack.c.b16 %v1248, %v1246
      %v1313 = vpack.c.b16 %v1249, %v1247
      %1378 = vmatprep.subr.bf16.mxu0 %v1251
      %1379 = vmatpush1.bf16.msra.mxu0 %v1250
      %1380 = vmatprep.subr.bf16.mxu0 %v1253
      %1381 = vmatpush1.bf16.msra.mxu0 %v1252
      %1382 = vmatprep.subr.bf16.mxu0 %v1255
      %1383 = vmatpush1.bf16.msra.mxu0 %v1254
      %1384 = vmatprep.subr.bf16.mxu0 %v1257
      %1385 = vmatpush1.bf16.msra.mxu0 %v1256
      %1386 = vmatprep.subr.bf16.mxu0 %v1259
      %1387 = vmatpush1.bf16.msra.mxu0 %v1258
      %1388 = vmatprep.subr.bf16.mxu0 %v1261
      %1389 = vmatpush1.bf16.msra.mxu0 %v1260
      %1390 = vmatprep.subr.bf16.mxu0 %v1263
      %1391 = vmatpush1.bf16.msra.mxu0 %v1262
      %1392 = vmatprep.subr.bf16.mxu0 %v1265
      %1393 = vmatpush1.bf16.msra.mxu0 %v1264
      %1394 = vmatprep.subr.bf16.mxu0 %v1267
      %1395 = vmatpush1.bf16.msra.mxu0 %v1266
      %1396 = vmatprep.subr.bf16.mxu0 %v1269
      %1397 = vmatpush1.bf16.msra.mxu0 %v1268
      %1398 = vmatprep.subr.bf16.mxu0 %v1271
      %1399 = vmatpush1.bf16.msra.mxu0 %v1270
      %1400 = vmatprep.subr.bf16.mxu0 %v1273
      %1401 = vmatpush1.bf16.msra.mxu0 %v1272
      %1402 = vmatprep.subr.bf16.mxu0 %v1275
      %1403 = vmatpush1.bf16.msra.mxu0 %v1274
      %1404 = vmatprep.subr.bf16.mxu0 %v1277
      %1405 = vmatpush1.bf16.msra.mxu0 %v1276
      %1406 = vmatprep.subr.bf16.mxu0 %v1279
      %1407 = vmatpush1.bf16.msra.mxu0 %v1278
      %1408 = vmatprep.subr.bf16.mxu0 %v1281
      %1409 = vmatpush1.bf16.msra.mxu0 %v1280
      %1410 = vmatprep.mubr.bf16.mxu0 %v971
      %1411 = vmatmul.mubr.bf16.gmra.mrb[0].mxu0 %v970
      %v1412 = vpop.f32.mrb[0].mxu0
      %v1413 = vadd.f32 %v1051, %v1412
      %v1414 = vpop.f32.mrb[0].mxu0
      %v1415 = vadd.f32 %v1055, %v1414
      %v1416 = vpop.f32.mrb[0].mxu0
      %v1417 = vadd.f32 %v1051, %v1416
      %v1418 = vpop.f32.mrb[0].mxu0
      %v1419 = vadd.f32 %v1055, %v1418
      %1420 = vmatprep.mubr.bf16.mxu0 %v975
      %1421 = vmatmul.mubr.bf16.gmra.mrb[0].mxu0 %v974
      %v1422 = vpop.f32.mrb[0].mxu0
      %v1423 = vadd.f32 %v1051, %v1422
      %v1424 = vpop.f32.mrb[0].mxu0
      %v1425 = vadd.f32 %v1055, %v1424
      %v1426 = vpop.f32.mrb[0].mxu0
      %v1427 = vadd.f32 %v1051, %v1426
      %v1428 = vpop.f32.mrb[0].mxu0
      %v1429 = vadd.f32 %v1055, %v1428
      %1430 = vmatprep.mubr.bf16.mxu0 %v979
      %1431 = vmatmul.mubr.bf16.gmra.mrb[0].mxu0 %v978
      %v1432 = vpop.f32.mrb[0].mxu0
      %v1433 = vadd.f32 %v1051, %v1432
      %v1434 = vpop.f32.mrb[0].mxu0
      %v1435 = vadd.f32 %v1055, %v1434
      %v1436 = vpop.f32.mrb[0].mxu0
      %v1437 = vadd.f32 %v1051, %v1436
      %v1438 = vpop.f32.mrb[0].mxu0
      %v1439 = vadd.f32 %v1055, %v1438
      %1440 = vdwg.mxu0
      %1441 = vmatprep.subr.bf16.mxu0 %v1283
      %1442 = vmatpush1.bf16.msra.mxu0 %v1282
      %1443 = vmatprep.subr.bf16.mxu0 %v1285
      %1444 = vmatpush1.bf16.msra.mxu0 %v1284
      %1445 = vmatprep.subr.bf16.mxu0 %v1287
      %1446 = vmatpush1.bf16.msra.mxu0 %v1286
      %1447 = vmatprep.subr.bf16.mxu0 %v1289
      %1448 = vmatpush1.bf16.msra.mxu0 %v1288
      %1449 = vmatprep.subr.bf16.mxu0 %v1291
      %1450 = vmatpush1.bf16.msra.mxu0 %v1290
      %1451 = vmatprep.subr.bf16.mxu0 %v1293
      %1452 = vmatpush1.bf16.msra.mxu0 %v1292
      %1453 = vmatprep.subr.bf16.mxu0 %v1295
      %1454 = vmatpush1.bf16.msra.mxu0 %v1294
      %1455 = vmatprep.subr.bf16.mxu0 %v1297
      %1456 = vmatpush1.bf16.msra.mxu0 %v1296
      %1457 = vmatprep.subr.bf16.mxu0 %v1299
      %1458 = vmatpush1.bf16.msra.mxu0 %v1298
      %1459 = vmatprep.subr.bf16.mxu0 %v1301
      %1460 = vmatpush1.bf16.msra.mxu0 %v1300
      %1461 = vmatprep.subr.bf16.mxu0 %v1303
      %1462 = vmatpush1.bf16.msra.mxu0 %v1302
      %1463 = vmatprep.subr.bf16.mxu0 %v1305
      %1464 = vmatpush1.bf16.msra.mxu0 %v1304
      %1465 = vmatprep.subr.bf16.mxu0 %v1307
      %1466 = vmatpush1.bf16.msra.mxu0 %v1306
      %1467 = vmatprep.subr.bf16.mxu0 %v1309
      %1468 = vmatpush1.bf16.msra.mxu0 %v1308
      %1469 = vmatprep.subr.bf16.mxu0 %v1311
      %1470 = vmatpush1.bf16.msra.mxu0 %v1310
      %1471 = vmatprep.subr.bf16.mxu0 %v1313
      %1472 = vmatpush1.bf16.msra.mxu0 %v1312
      %1473 = vmatprep.mubr.bf16.mxu0 %v973
      %1474 = vmatmul.mubr.bf16.gmra.mrb[0].mxu0 %v972
      %v1475 = vpop.f32.mrb[0].mxu0
      %v1476 = vadd.f32 %v1413, %v1475
      %v1477 = vpop.f32.mrb[0].mxu0
      %v1478 = vadd.f32 %v1415, %v1477
      %v1479 = vpop.f32.mrb[0].mxu0
      %v1480 = vadd.f32 %v1417, %v1479
      %v1481 = vpop.f32.mrb[0].mxu0
      %v1482 = vadd.f32 %v1419, %v1481
      %1483 = vmatprep.mubr.bf16.mxu0 %v977
      %1484 = vmatmul.mubr.bf16.gmra.mrb[0].mxu0 %v976
      %v1485 = vpop.f32.mrb[0].mxu0
      %v1486 = vadd.f32 %v1423, %v1485
      %v1487 = vpop.f32.mrb[0].mxu0
      %v1488 = vadd.f32 %v1425, %v1487
      %v1489 = vpop.f32.mrb[0].mxu0
      %v1490 = vadd.f32 %v1427, %v1489
      %v1491 = vpop.f32.mrb[0].mxu0
      %v1492 = vadd.f32 %v1429, %v1491
      %1493 = vmatprep.mubr.bf16.mxu0 %v981
      %1494 = vmatmul.mubr.bf16.gmra.mrb[0].mxu0 %v980
      %v1495 = vpop.f32.mrb[0].mxu0
      %v1496 = vadd.f32 %v1433, %v1495
      %v1497 = vpop.f32.mrb[0].mxu0
      %v1498 = vadd.f32 %v1435, %v1497
      %v1499 = vpop.f32.mrb[0].mxu0
      %v1500 = vadd.f32 %v1437, %v1499
      %v1501 = vpop.f32.mrb[0].mxu0
      %v1502 = vadd.f32 %v1439, %v1501
      %1503 = vdwg.mxu0
      %v1504 = vmax.f32 %v1476, 0.0
      %v1505 = vmax.f32 %v1478, 0.0
      %v1506 = vmax.f32 %v1480, 0.0
      %v1507 = vmax.f32 %v1482, 0.0
      %v1508 = vmax.f32 %v1486, 0.0
      %v1509 = vmax.f32 %v1488, 0.0
      %v1510 = vmax.f32 %v1490, 0.0
      %v1511 = vmax.f32 %v1492, 0.0
      %v1512 = vmax.f32 %v1496, 0.0
      %v1513 = vmax.f32 %v1498, 0.0
      %v1514 = vmax.f32 %v1500, 0.0
      %v1515 = vmax.f32 %v1502, 0.0
      %v1516 = vpack.c.bf16 %v1506, %v1504
      %v1517 = vpack.c.bf16 %v1507, %v1505
      %v1518 = vpack.c.bf16 %v1510, %v1508
      %v1519 = vpack.c.bf16 %v1511, %v1509
      %v1520 = vpack.c.bf16 %v1514, %v1512
      %v1521 = vpack.c.bf16 %v1515, %v1513
      %v1522 = vld [vmem:[%s7] sm:$0xf]
      %v1523 = vld [vmem:[%s7 + $0x4] sm:$0xf]
      %v1524 = vld [vmem:[%s7 + $0x8] sm:$0xf]
      %v1525 = vld [vmem:[%s7 + $0xc] sm:$0xf]
      %v1526 = vld [vmem:[%s7 + $0x10] sm:$0xf]
      %v1527 = vld [vmem:[%s7 + $0x14] sm:$0xf]
      %v1528 = vld [vmem:[%s7 + $0x18] sm:$0xf]
      %v1529 = vld [vmem:[%s7 + $0x1c] sm:$0xf]
      %v1530 = vld [vmem:[%s7 + $0x20] sm:$0xf]
      %v1531 = vld [vmem:[%s7 + $0x24] sm:$0xf]
      %v1532 = vld [vmem:[%s7 + $0x28] sm:$0xf]
      %v1533 = vld [vmem:[%s7 + $0x2c] sm:$0xf]
      %v1534 = vld [vmem:[%s7 + $0x30] sm:$0xf]
      %v1535 = vld [vmem:[%s7 + $0x34] sm:$0xf]
      %v1536 = vld [vmem:[%s7 + $0x38] sm:$0xf]
      %v1537 = vld [vmem:[%s7 + $0x3c] sm:$0xf]
      %v1538 = vld [vmem:[%s7 + $0x40] sm:$0xf]
      %v1539 = vld [vmem:[%s7 + $0x44] sm:$0xf]
      %v1540 = vld [vmem:[%s7 + $0x48] sm:$0xf]
      %v1541 = vld [vmem:[%s7 + $0x4c] sm:$0xf]
      %v1542 = vld [vmem:[%s7 + $0x50] sm:$0xf]
      %v1543 = vld [vmem:[%s7 + $0x54] sm:$0xf]
      %v1544 = vld [vmem:[%s7 + $0x58] sm:$0xf]
      %v1545 = vld [vmem:[%s7 + $0x5c] sm:$0xf]
      %v1546 = vld [vmem:[%s7 + $0x60] sm:$0xf]
      %v1547 = vld [vmem:[%s7 + $0x64] sm:$0xf]
      %v1548 = vld [vmem:[%s7 + $0x68] sm:$0xf]
      %v1549 = vld [vmem:[%s7 + $0x6c] sm:$0xf]
      %v1550 = vld [vmem:[%s7 + $0x70] sm:$0xf]
      %v1551 = vld [vmem:[%s7 + $0x74] sm:$0xf]
      %v1552 = vld [vmem:[%s7 + $0x78] sm:$0xf]
      %v1553 = vld [vmem:[%s7 + $0x7c] sm:$0xf]
      %v1554 = vld [vmem:[%s8] sm:$0x1]
      %v1556 = vlaneseq
      %v1557 = vshrl.u32 %v1556, 7
      %v1558 = vsub.s32 0, %v1557
      %v1559 = vrot.slane %v1554, %v1558
      %v1593 = vunpack.c.l.b16 %v1522
      %v1594 = vunpack.c.l.b16 %v1523
      %v1595 = vunpack.c.l.b16 %v1524
      %v1596 = vunpack.c.l.b16 %v1525
      %v1597 = vunpack.c.l.b16 %v1526
      %v1598 = vunpack.c.l.b16 %v1527
      %v1599 = vunpack.c.l.b16 %v1528
      %v1600 = vunpack.c.l.b16 %v1529
      %v1601 = vunpack.c.l.b16 %v1530
      %v1602 = vunpack.c.l.b16 %v1531
      %v1603 = vunpack.c.l.b16 %v1532
      %v1604 = vunpack.c.l.b16 %v1533
      %v1605 = vunpack.c.l.b16 %v1534
      %v1606 = vunpack.c.l.b16 %v1535
      %v1607 = vunpack.c.l.b16 %v1536
      %v1608 = vunpack.c.l.b16 %v1537
      %v1609 = vunpack.c.l.b16 %v1538
      %v1610 = vunpack.c.l.b16 %v1539
      %v1611 = vunpack.c.l.b16 %v1540
      %v1612 = vunpack.c.l.b16 %v1541
      %v1613 = vunpack.c.l.b16 %v1542
      %v1614 = vunpack.c.l.b16 %v1543
      %v1615 = vunpack.c.l.b16 %v1544
      %v1616 = vunpack.c.l.b16 %v1545
      %v1617 = vunpack.c.l.b16 %v1546
      %v1618 = vunpack.c.l.b16 %v1547
      %v1619 = vunpack.c.l.b16 %v1548
      %v1620 = vunpack.c.l.b16 %v1549
      %v1621 = vunpack.c.l.b16 %v1550
      %v1622 = vunpack.c.l.b16 %v1551
      %v1623 = vunpack.c.l.b16 %v1552
      %v1624 = vunpack.c.l.b16 %v1553
      %v1625 = vpack.c.b16 %v1594, %v1593
      %v1626 = vpack.c.b16 %v1596, %v1595
      %v1627 = vpack.c.b16 %v1598, %v1597
      %v1628 = vpack.c.b16 %v1600, %v1599
      %v1629 = vpack.c.b16 %v1602, %v1601
      %v1630 = vpack.c.b16 %v1604, %v1603
      %v1631 = vpack.c.b16 %v1606, %v1605
      %v1632 = vpack.c.b16 %v1608, %v1607
      %v1633 = vpack.c.b16 %v1610, %v1609
      %v1634 = vpack.c.b16 %v1612, %v1611
      %v1635 = vpack.c.b16 %v1614, %v1613
      %v1636 = vpack.c.b16 %v1616, %v1615
      %v1637 = vpack.c.b16 %v1618, %v1617
      %v1638 = vpack.c.b16 %v1620, %v1619
      %v1639 = vpack.c.b16 %v1622, %v1621
      %v1640 = vpack.c.b16 %v1624, %v1623
      %1657 = vmatprep.subr.bf16.mxu0 0
      %1658 = vmatpush1.bf16.msra.mxu0 %v1625
      %1659 = vmatprep.subr.bf16.mxu0 0
      %1660 = vmatpush1.bf16.msra.mxu0 %v1626
      %1661 = vmatprep.subr.bf16.mxu0 0
      %1662 = vmatpush1.bf16.msra.mxu0 %v1627
      %1663 = vmatprep.subr.bf16.mxu0 0
      %1664 = vmatpush1.bf16.msra.mxu0 %v1628
      %1665 = vmatprep.subr.bf16.mxu0 0
      %1666 = vmatpush1.bf16.msra.mxu0 %v1629
      %1667 = vmatprep.subr.bf16.mxu0 0
      %1668 = vmatpush1.bf16.msra.mxu0 %v1630
      %1669 = vmatprep.subr.bf16.mxu0 0
      %1670 = vmatpush1.bf16.msra.mxu0 %v1631
      %1671 = vmatprep.subr.bf16.mxu0 0
      %1672 = vmatpush1.bf16.msra.mxu0 %v1632
      %1673 = vmatprep.subr.bf16.mxu0 0
      %1674 = vmatpush1.bf16.msra.mxu0 %v1633
      %1675 = vmatprep.subr.bf16.mxu0 0
      %1676 = vmatpush1.bf16.msra.mxu0 %v1634
      %1677 = vmatprep.subr.bf16.mxu0 0
      %1678 = vmatpush1.bf16.msra.mxu0 %v1635
      %1679 = vmatprep.subr.bf16.mxu0 0
      %1680 = vmatpush1.bf16.msra.mxu0 %v1636
      %1681 = vmatprep.subr.bf16.mxu0 0
      %1682 = vmatpush1.bf16.msra.mxu0 %v1637
      %1683 = vmatprep.subr.bf16.mxu0 0
      %1684 = vmatpush1.bf16.msra.mxu0 %v1638
      %1685 = vmatprep.subr.bf16.mxu0 0
      %1686 = vmatpush1.bf16.msra.mxu0 %v1639
      %1687 = vmatprep.subr.bf16.mxu0 0
      %1688 = vmatpush1.bf16.msra.mxu0 %v1640
      %1689 = vmatprep.mubr.bf16.mxu0 %v1517
      %1690 = vmatmul.mubr.bf16.gmra.mrb[0].mxu0 %v1516
      %v1691 = vpop.f32.mrb[0].mxu0
      %v1692 = vadd.f32 %v1559, %v1691
      %v1693 = vpop.f32.mrb[0].mxu0
      %v1694 = vpop.f32.mrb[0].mxu0
      %v1695 = vadd.f32 %v1559, %v1694
      %v1696 = vpop.f32.mrb[0].mxu0
      %1697 = vmatprep.mubr.bf16.mxu0 %v1519
      %1698 = vmatmul.mubr.bf16.gmra.mrb[0].mxu0 %v1518
      %v1699 = vpop.f32.mrb[0].mxu0
      %v1700 = vadd.f32 %v1559, %v1699
      %v1701 = vpop.f32.mrb[0].mxu0
      %v1702 = vpop.f32.mrb[0].mxu0
      %v1703 = vadd.f32 %v1559, %v1702
      %v1704 = vpop.f32.mrb[0].mxu0
      %1705 = vmatprep.mubr.bf16.mxu0 %v1521
      %1706 = vmatmul.mubr.bf16.gmra.mrb[0].mxu0 %v1520
      %v1707 = vpop.f32.mrb[0].mxu0
      %v1708 = vadd.f32 %v1559, %v1707
      %v1709 = vpop.f32.mrb[0].mxu0
      %v1710 = vpop.f32.mrb[0].mxu0
      %v1711 = vadd.f32 %v1559, %v1710
      %v1712 = vpop.f32.mrb[0].mxu0
      %1713 = vdwg.mxu0
      %v1714 = vmax.f32 %v1692, 0.0
      %v1715 = vmax.f32 %v1695, 0.0
      %v1716 = vmax.f32 %v1700, 0.0
      %v1717 = vmax.f32 %v1703, 0.0
      %v1718 = vmax.f32 %v1708, 0.0
      %v1719 = vmax.f32 %v1711, 0.0
      %v1720 = vpack.c.bf16 %v1715, %v1714
      %v1721 = vpack.c.bf16 %v1717, %v1716
      %v1722 = vpack.c.bf16 %v1719, %v1718
      %v1723 = vld [vmem:[%s9] sm:$0xf]
      %v1724 = vld [vmem:[%s9 + $0x4] sm:$0xf]
      %v1725 = vld [vmem:[%s9 + $0x8] sm:$0xf]
      %v1726 = vld [vmem:[%s9 + $0xc] sm:$0xf]
      %v1727 = vld [vmem:[%s9 + $0x10] sm:$0xf]
      %v1728 = vld [vmem:[%s9 + $0x14] sm:$0xf]
      %v1729 = vld [vmem:[%s9 + $0x18] sm:$0xf]
      %v1730 = vld [vmem:[%s9 + $0x1c] sm:$0xf]
      %v1731 = vld [vmem:[%s9 + $0x20] sm:$0xf]
      %v1732 = vld [vmem:[%s9 + $0x24] sm:$0xf]
      %v1733 = vld [vmem:[%s9 + $0x28] sm:$0xf]
      %v1734 = vld [vmem:[%s9 + $0x2c] sm:$0xf]
      %v1735 = vld [vmem:[%s9 + $0x30] sm:$0xf]
      %v1736 = vld [vmem:[%s9 + $0x34] sm:$0xf]
      %v1737 = vld [vmem:[%s9 + $0x38] sm:$0xf]
      %v1738 = vld [vmem:[%s9 + $0x3c] sm:$0xf]
      %v1739 = vld [vmem:[%s10] sm:$0x1]
      %v1741 = vlaneseq
      %v1742 = vshrl.u32 %v1741, 7
      %v1743 = vsub.s32 0, %v1742
      %v1744 = vrot.slane %v1739, %v1743
      %v1762 = vunpack.c.l.b16 %v1723
      %v1763 = vunpack.c.l.b16 %v1724
      %v1764 = vunpack.c.l.b16 %v1725
      %v1765 = vunpack.c.l.b16 %v1726
      %v1766 = vunpack.c.l.b16 %v1727
      %v1767 = vunpack.c.l.b16 %v1728
      %v1768 = vunpack.c.l.b16 %v1729
      %v1769 = vunpack.c.l.b16 %v1730
      %v1770 = vunpack.c.l.b16 %v1731
      %v1771 = vunpack.c.l.b16 %v1732
      %v1772 = vunpack.c.l.b16 %v1733
      %v1773 = vunpack.c.l.b16 %v1734
      %v1774 = vunpack.c.l.b16 %v1735
      %v1775 = vunpack.c.l.b16 %v1736
      %v1776 = vunpack.c.l.b16 %v1737
      %v1777 = vunpack.c.l.b16 %v1738
      %v1778 = vpack.c.b16 %v1763, %v1762
      %v1779 = vpack.c.b16 %v1765, %v1764
      %v1780 = vpack.c.b16 %v1767, %v1766
      %v1781 = vpack.c.b16 %v1769, %v1768
      %v1782 = vpack.c.b16 %v1771, %v1770
      %v1783 = vpack.c.b16 %v1773, %v1772
      %v1784 = vpack.c.b16 %v1775, %v1774
      %v1785 = vpack.c.b16 %v1777, %v1776
      %1794 = vmatprep.subr.bf16.mxu0 0
      %1795 = vmatpush1.bf16.msra.mxu0 %v1778
      %1796 = vmatprep.subr.bf16.mxu0 0
      %1797 = vmatpush1.bf16.msra.mxu0 %v1779
      %1798 = vmatprep.subr.bf16.mxu0 0
      %1799 = vmatpush1.bf16.msra.mxu0 %v1780
      %1800 = vmatprep.subr.bf16.mxu0 0
      %1801 = vmatpush1.bf16.msra.mxu0 %v1781
      %1802 = vmatprep.subr.bf16.mxu0 0
      %1803 = vmatpush1.bf16.msra.mxu0 %v1782
      %1804 = vmatprep.subr.bf16.mxu0 0
      %1805 = vmatpush1.bf16.msra.mxu0 %v1783
      %1806 = vmatprep.subr.bf16.mxu0 0
      %1807 = vmatpush1.bf16.msra.mxu0 %v1784
      %1808 = vmatprep.subr.bf16.mxu0 0
      %1809 = vmatpush1.bf16.msra.mxu0 %v1785
      %1810 = vmatprep.subr.bf16.mxu0 0
      %1811 = vmatpush1.bf16.msra.mxu0 0
      %1812 = vmatprep.subr.bf16.mxu0 0
      %1813 = vmatpush1.bf16.msra.mxu0 0
      %1814 = vmatprep.subr.bf16.mxu0 0
      %1815 = vmatpush1.bf16.msra.mxu0 0
      %1816 = vmatprep.subr.bf16.mxu0 0
      %1817 = vmatpush1.bf16.msra.mxu0 0
      %1818 = vmatprep.subr.bf16.mxu0 0
      %1819 = vmatpush1.bf16.msra.mxu0 0
      %1820 = vmatprep.subr.bf16.mxu0 0
      %1821 = vmatpush1.bf16.msra.mxu0 0
      %1822 = vmatprep.subr.bf16.mxu0 0
      %1823 = vmatpush1.bf16.msra.mxu0 0
      %1824 = vmatprep.subr.bf16.mxu0 0
      %1825 = vmatpush1.bf16.msra.mxu0 0
      %1826 = vmatprep.mubr.bf16.mxu0 0
      %1827 = vmatmul.mubr.bf16.gmra.mrb[0].mxu0 %v1720
      %v1828 = vpop.f32.mrb[0].mxu0
      %v1829 = vadd.f32 %v1744, %v1828
      %v1830 = vpop.f32.mrb[0].mxu0
      %v1831 = vpop.f32.mrb[0].mxu0
      %v1832 = vadd.f32 %v1744, %v1831
      %v1833 = vpop.f32.mrb[0].mxu0
      %1834 = vmatprep.mubr.bf16.mxu0 0
      %1835 = vmatmul.mubr.bf16.gmra.mrb[0].mxu0 %v1721
      %v1836 = vpop.f32.mrb[0].mxu0
      %v1837 = vadd.f32 %v1744, %v1836
      %v1838 = vpop.f32.mrb[0].mxu0
      %v1839 = vpop.f32.mrb[0].mxu0
      %v1840 = vadd.f32 %v1744, %v1839
      %v1841 = vpop.f32.mrb[0].mxu0
      %1842 = vmatprep.mubr.bf16.mxu0 0
      %1843 = vmatmul.mubr.bf16.gmra.mrb[0].mxu0 %v1722
      %v1844 = vpop.f32.mrb[0].mxu0
      %v1845 = vadd.f32 %v1744, %v1844
      %v1846 = vpop.f32.mrb[0].mxu0
      %v1847 = vpop.f32.mrb[0].mxu0
      %v1848 = vadd.f32 %v1744, %v1847
      %v1849 = vpop.f32.mrb[0].mxu0
      %1850 = vdwg.mxu0
      %v1851 = vmax.f32 %v1829, 0.0
      %v1852 = vmax.f32 %v1832, 0.0
      %v1853 = vmax.f32 %v1837, 0.0
      %v1854 = vmax.f32 %v1840, 0.0
      %v1855 = vmax.f32 %v1845, 0.0
      %v1856 = vmax.f32 %v1848, 0.0
      %v1857 = vpack.c.bf16 %v1852, %v1851
      %v1858 = vpack.c.bf16 %v1854, %v1853
      %v1859 = vpack.c.bf16 %v1856, %v1855
      %v1860 = vld [vmem:[%s11] sm:$0xf]
      %v1861 = vld [vmem:[%s11 + $0x4] sm:$0xf]
      %v1862 = vld [vmem:[%s11 + $0x8] sm:$0xf]
      %v1863 = vld [vmem:[%s11 + $0xc] sm:$0xf]
      %v1864 = vld [vmem:[%s11 + $0x10] sm:$0xf]
      %v1865 = vld [vmem:[%s11 + $0x14] sm:$0xf]
      %v1866 = vld [vmem:[%s11 + $0x18] sm:$0xf]
      %v1867 = vld [vmem:[%s11 + $0x1c] sm:$0xf]
      %v1868 = vld [vmem:[%s11 + $0x20] sm:$0xf]
      %v1869 = vld [vmem:[%s11 + $0x24] sm:$0xf]
      %v1870 = vld [vmem:[%s11 + $0x28] sm:$0xf]
      %v1871 = vld [vmem:[%s11 + $0x2c] sm:$0xf]
      %v1872 = vld [vmem:[%s11 + $0x30] sm:$0xf]
      %v1873 = vld [vmem:[%s11 + $0x34] sm:$0xf]
      %v1874 = vld [vmem:[%s11 + $0x38] sm:$0xf]
      %v1875 = vld [vmem:[%s11 + $0x3c] sm:$0xf]
      %v1876 = vld [vmem:[%s12] sm:$0x1]
      %v1878 = vlaneseq
      %v1879 = vshrl.u32 %v1878, 7
      %v1880 = vsub.s32 0, %v1879
      %v1881 = vrot.slane %v1876, %v1880
      %v1899 = vunpack.c.l.b16 %v1860
      %v1900 = vunpack.c.l.b16 %v1861
      %v1901 = vunpack.c.l.b16 %v1862
      %v1902 = vunpack.c.l.b16 %v1863
      %v1903 = vunpack.c.l.b16 %v1864
      %v1904 = vunpack.c.l.b16 %v1865
      %v1905 = vunpack.c.l.b16 %v1866
      %v1906 = vunpack.c.l.b16 %v1867
      %v1907 = vunpack.c.l.b16 %v1868
      %v1908 = vunpack.c.l.b16 %v1869
      %v1909 = vunpack.c.l.b16 %v1870
      %v1910 = vunpack.c.l.b16 %v1871
      %v1911 = vunpack.c.l.b16 %v1872
      %v1912 = vunpack.c.l.b16 %v1873
      %v1913 = vunpack.c.l.b16 %v1874
      %v1914 = vunpack.c.l.b16 %v1875
      %v1915 = vpack.c.b16 %v1900, %v1899
      %v1916 = vpack.c.b16 %v1902, %v1901
      %v1917 = vpack.c.b16 %v1904, %v1903
      %v1918 = vpack.c.b16 %v1906, %v1905
      %v1919 = vpack.c.b16 %v1908, %v1907
      %v1920 = vpack.c.b16 %v1910, %v1909
      %v1921 = vpack.c.b16 %v1912, %v1911
      %v1922 = vpack.c.b16 %v1914, %v1913
      %1931 = vmatprep.subr.bf16.mxu0 0
      %1932 = vmatpush1.bf16.msra.mxu0 %v1915
      %1933 = vmatprep.subr.bf16.mxu0 0
      %1934 = vmatpush1.bf16.msra.mxu0 %v1916
      %1935 = vmatprep.subr.bf16.mxu0 0
      %1936 = vmatpush1.bf16.msra.mxu0 %v1917
      %1937 = vmatprep.subr.bf16.mxu0 0
      %1938 = vmatpush1.bf16.msra.mxu0 %v1918
      %1939 = vmatprep.subr.bf16.mxu0 0
      %1940 = vmatpush1.bf16.msra.mxu0 %v1919
      %1941 = vmatprep.subr.bf16.mxu0 0
      %1942 = vmatpush1.bf16.msra.mxu0 %v1920
      %1943 = vmatprep.subr.bf16.mxu0 0
      %1944 = vmatpush1.bf16.msra.mxu0 %v1921
      %1945 = vmatprep.subr.bf16.mxu0 0
      %1946 = vmatpush1.bf16.msra.mxu0 %v1922
      %1947 = vmatprep.subr.bf16.mxu0 0
      %1948 = vmatpush1.bf16.msra.mxu0 0
      %1949 = vmatprep.subr.bf16.mxu0 0
      %1950 = vmatpush1.bf16.msra.mxu0 0
      %1951 = vmatprep.subr.bf16.mxu0 0
      %1952 = vmatpush1.bf16.msra.mxu0 0
      %1953 = vmatprep.subr.bf16.mxu0 0
      %1954 = vmatpush1.bf16.msra.mxu0 0
      %1955 = vmatprep.subr.bf16.mxu0 0
      %1956 = vmatpush1.bf16.msra.mxu0 0
      %1957 = vmatprep.subr.bf16.mxu0 0
      %1958 = vmatpush1.bf16.msra.mxu0 0
      %1959 = vmatprep.subr.bf16.mxu0 0
      %1960 = vmatpush1.bf16.msra.mxu0 0
      %1961 = vmatprep.subr.bf16.mxu0 0
      %1962 = vmatpush1.bf16.msra.mxu0 0
      %1963 = vmatprep.mubr.bf16.mxu0 0
      %1964 = vmatmul.mubr.bf16.gmra.mrb[0].mxu0 %v1857
      %v1965 = vpop.f32.mrb[0].mxu0
      %v1966 = vadd.f32 %v1881, %v1965
      %v1967 = vpop.f32.mrb[0].mxu0
      %v1968 = vpop.f32.mrb[0].mxu0
      %v1969 = vadd.f32 %v1881, %v1968
      %v1970 = vpop.f32.mrb[0].mxu0
      %1971 = vmatprep.mubr.bf16.mxu0 0
      %1972 = vmatmul.mubr.bf16.gmra.mrb[0].mxu0 %v1858
      %v1973 = vpop.f32.mrb[0].mxu0
      %v1974 = vadd.f32 %v1881, %v1973
      %v1975 = vpop.f32.mrb[0].mxu0
      %v1976 = vpop.f32.mrb[0].mxu0
      %v1977 = vadd.f32 %v1881, %v1976
      %v1978 = vpop.f32.mrb[0].mxu0
      %1979 = vmatprep.mubr.bf16.mxu0 0
      %1980 = vmatmul.mubr.bf16.gmra.mrb[0].mxu0 %v1859
      %v1981 = vpop.f32.mrb[0].mxu0
      %v1982 = vadd.f32 %v1881, %v1981
      %v1983 = vpop.f32.mrb[0].mxu0
      %v1984 = vpop.f32.mrb[0].mxu0
      %v1985 = vadd.f32 %v1881, %v1984
      %v1986 = vpop.f32.mrb[0].mxu0
      %1987 = vdwg.mxu0
      %1988 = vst [vmem:[%s442] sm:$0xff] %v1966
      %1989 = vst [vmem:[%s442 + $0x8] sm:$0xff] %v1969
      %1990 = vst [vmem:[%s442 + $0x10] sm:$0xff] %v1974
      %1991 = vst [vmem:[%s442 + $0x18] sm:$0xff] %v1977
      %1992 = vst [vmem:[%s442 + $0x20] sm:$0xff] %v1982
      %1993 = vst [vmem:[%s442 + $0x28] sm:$0xff] %v1985
      %s1994 = smul.u32 6, %s24
      %p1995 = scmp.lt.s32.totalorder %s1994, 11
      %s1996 = scalar_select %p1995, %s1994, 11
      %s1997 = smul.addr %s1996, 8
      %s1998 = scalar_lea.vmem %s13, %s1997
      // Predicated region
      $region73: #{prism_decoder_forward.3} parent=71 // pred_check
        %p1999 = pneg %p320
      $region74: #{prism_decoder_forward.3} parent=71 // pred_check_branch
        %2001 = sbr.rel (%p1999) target = $region76
      $region75: #{prism_decoder_forward.3} parent=71 // pred_region
        %s2002 = smul.u32 6, %s24
      $region76: #{prism_decoder_forward.3} parent=71 // pred_fallthru
        _
    $region72: #{prism_decoder_forward.3} parent=5 // pred_fallthru
      _
    %p2003 = scmp.le.s32.totalorder 2, %s19
    // Predicated region
    $region77: #{prism_decoder_forward.3} parent=5 // pred_check
      %p2004 = pneg %p2003
    $region78: #{prism_decoder_forward.3} parent=5 // pred_check_branch
      %2006 = sbr.rel (%p2004) target = $region80
    $region79: #{prism_decoder_forward.3} parent=5 // pred_region
      %s2007 = ssub.s32 %s19, 2
      // Predicated region
      $region81: #{prism_decoder_forward.3} parent=79 // pred_check
        %p2008 = pneg %p326
      $region82: #{prism_decoder_forward.3} parent=79 // pred_check_branch
        %2010 = sbr.rel (%p2008) target = $region84
      $region83: #{prism_decoder_forward.3} parent=79 // pred_region
        %s2011 = smul.u32 6, %s25
        %p2012 = scmp.lt.s32.totalorder %s2011, 11
        %s2013 = scalar_select %p2012, %s2011, 11
        %s2014 = smul.addr %s2013, 8
        %s2015 = scalar_lea.vmem %s13, %s2014
      $region84: #{prism_decoder_forward.3} parent=79 // pred_fallthru
        _
    $region80: #{prism_decoder_forward.3} parent=5 // pred_fallthru
      _
  $region6: #{prism_decoder_forward.3} parent=0 // loop_footer
    %s23 = sadd.s32 1, %s19
  $region7: #{prism_decoder_forward.3} parent=0 // loop_footer_branch
    %18 = sbr.rel target = $region3
  $region8: #{prism_decoder_forward.3} parent=0 // loop_exit
    _

</llo_original>
